<compile_context>
chip_gen: v7x
topology: tpu7x:2x2x1
jax: 0.10.0
libtpu: 0.0.40
codegen_flags: <defaults>
</compile_context>

<pallas_src>
import math

import jax
import jax.numpy as jnp
from jax.experimental import pallas as pl
from jax.experimental.pallas import tpu as pltpu


def _round_up(x, m):
    return ((x + m - 1) // m) * m


def _make_mlp_kernel(activations):
    """Fused MLP kernel body.

    activations : tuple, one entry per Linear layer; None == no activation.
    Kernel args : (x_ref, w0, b0, w1, b1, ..., wN, bN, out_ref)
    Weights are stored pre-transposed as (in, out); biases as (1, out).
    """

    def kernel(x_ref, *refs):
        out_ref = refs[-1]
        params = refs[:-1]
        h = x_ref[...].astype(jnp.float32)          # cast in-kernel, not in the wrapper
        for li, act in enumerate(activations):
            w = params[2 * li][...]                 # (in, out)
            b = params[2 * li + 1][...]             # (1, out) -> broadcasts over rows
            h = jnp.dot(h, w,
                        preferred_element_type=jnp.float32,
                        precision=jax.lax.Precision.HIGHEST) + b
            if act is not None:
                h = act(h)
        out_ref[...] = h.astype(out_ref.dtype)

    return kernel


def _choose_tile_rows(rows, d_in, d_out, in_itemsize):
    """Row-tile size: ~2 MiB of in+out block traffic per grid step (<= 4096 rows),
    and at least 2 grid steps when possible (v7x has 2 TensorCores)."""
    if rows <= 8:
        return rows                                  # single full-extent block
    per_row = d_in * in_itemsize + d_out * 4
    t = max(8, min(4096, (2 << 20) // max(per_row, 1)))
    t = min(t, _round_up(pl.cdiv(rows, 2), 8))       # guarantee >= 2 grid steps
    return max(8, (t // 8) * 8)


def _mlp_pallas(x2, weights, biases, activations, out_dtype):
    rows, d_in = x2.shape
    d_out = weights[-1].shape[-1]
    tile_rows = _choose_tile_rows(rows, d_in, d_out, x2.dtype.itemsize)
    grid = (pl.cdiv(rows, tile_rows),)               # partial last block: writes are masked

    in_specs = [pl.BlockSpec((tile_rows, d_in), lambda i: (i, 0))]
    flat_params = []
    for w, b in zip(weights, biases):
        # Constant index_map => logically VMEM-resident.  At these widths the default
        # double-buffering of the weight blocks is negligible; for very wide hidden
        # layers pipeline_mode=pl.Buffered(1) would halve their footprint.
        in_specs.append(pl.BlockSpec(w.shape, lambda i: (0, 0)))
        in_specs.append(pl.BlockSpec(b.shape, lambda i: (0, 0)))
        flat_params.extend([w, b])

    # Explicit VMEM budget (cap well under v7x's 64 MiB physical VMEM).
    param_bytes = sum(int(p.size) * p.dtype.itemsize for p in flat_params)
    dmax = max([d_in, d_out] + [w.shape[1] for w in weights])
    block_bytes = tile_rows * (d_in * x2.dtype.itemsize + d_out * 4)
    interm_bytes = tile_rows * dmax * 4
    vmem_needed = 2 * block_bytes + 2 * param_bytes + 2 * interm_bytes
    vmem_limit = int(min(max(2 * vmem_needed, 32 << 20), 48 << 20))

    return pl.pallas_call(
        _make_mlp_kernel(tuple(activations)),
        grid_spec=pltpu.PrefetchScalarGridSpec(
            num_scalar_prefetch=0,
            grid=grid,
            in_specs=in_specs,
            out_specs=pl.BlockSpec((tile_rows, d_out), lambda i: (i, 0)),
        ),
        out_shape=jax.ShapeDtypeStruct((rows, d_out), out_dtype),
        compiler_params=pltpu.CompilerParams(
            dimension_semantics=("parallel",),
            vmem_limit_bytes=vmem_limit,
        ),
    )(x2, *flat_params)


def _choose_pack_factor(rows, dims, itemsize=4):
    """Rows-per-packed-row P for the lane-dense (block-diagonal-weight) layout.

    Only used when every feature width is far below the 128-lane vreg width;
    gated on the P^2 blow-up of the block-diagonal weights."""
    dmax = max(dims)
    if dmax >= 128:
        return 1
    wsum = sum(a * b for a, b in zip(dims[:-1], dims[1:]))
    for p in (8, 4, 2):
        if rows % p != 0:
            continue
        if p * dmax > 512:
            continue
        if p * p * wsum * itemsize > (4 << 20):
            continue
        return p
    return 1


def feedforward_nn_decoder_forward(input_data, weights, biases, activations):
    """Pallas implementation of FeedforwardNNDecoder.forward.

    input_data : (..., latent_dims) float array
    weights    : list of (in_dim, out_dim) arrays (torch Linear weight, transposed)
    biases     : list of (1, out_dim) arrays
    activations: list (len == len(weights)) of jnp callables or None (last is None)
    returns    : (..., observed_dims) array
    """
    assert len(weights) == len(biases) == len(activations)
    lead_shape = input_data.shape[:-1]
    d_in = input_data.shape[-1]
    d_out = weights[-1].shape[-1]
    rows = int(math.prod(lead_shape)) if lead_shape else 1
    out_dtype = jnp.result_type(input_data.dtype, weights[0].dtype)

    x2 = input_data.reshape(rows, d_in)              # no wrapper-side dtype cast

    dims = [d_in] + [w.shape[-1] for w in weights]
    pack = _choose_pack_factor(rows, dims)
    if pack > 1:
        # Lane-dense layout: fold `pack` logical rows into one row (free, row-major
        # contiguous reshape) and make the weights block-diagonal so the SAME fused
        # kernel computes the identical MLP on lane-dense activations.
        x2 = x2.reshape(rows // pack, pack * d_in)
        eye = jnp.eye(pack, dtype=weights[0].dtype)
        weights = [jnp.kron(eye, w) for w in weights]
        biases = [jnp.tile(b, (1, pack)) for b in biases]

    out = _mlp_pallas(x2, weights, biases, activations, out_dtype)

    if pack > 1:
        out = out.reshape(rows, d_out)               # free, row-major contiguous
    return out.reshape(*lead_shape, d_out)


def init_decoder_params(key, latent_dims, layers_list, observed_dims):
    """torch.nn.Linear-style init.  Weights stored pre-transposed as (in, out)."""
    sizes = [latent_dims] + [s for s, _ in layers_list] + [observed_dims]
    activations = [a for _, a in layers_list] + [None]
    weights, biases = [], []
    for i in range(len(sizes) - 1):
        fan_in, fan_out = sizes[i], sizes[i + 1]
        key, kw, kb = jax.random.split(key, 3)
        bound = 1.0 / math.sqrt(fan_in)
        weights.append(jax.random.uniform(kw, (fan_in, fan_out), jnp.float32, -bound, bound))
        biases.append(jax.random.uniform(kb, (1, fan_out), jnp.float32, -bound, bound))
    return weights, biases, tuple(activations)


def _reference_forward(x, weights, biases, activations):
    """Pure-JAX reference (mirrors the PyTorch module's forward)."""
    h = x.astype(jnp.float32)
    for w, b, act in zip(weights, biases, activations):
        h = jnp.dot(h, w, precision=jax.lax.Precision.HIGHEST) + b[0]
        if act is not None:
            h = act(h)
    return h


if __name__ == "__main__":
    key = jax.random.PRNGKey(0)

    latent_dims, observed_dims = 8, 16
    # layers_list analogous to [(32, nn.Tanh()), (32, nn.ReLU())] in the PyTorch module.
    layers_list = [(32, jnp.tanh), (32, jax.nn.relu)]

    key, kp = jax.random.split(key)
    weights, biases, activations = init_decoder_params(
        kp, latent_dims, layers_list, observed_dims)

    # Case 1: (batch, seq) leading dims -> packed lane-dense path.
    key, kx = jax.random.split(key)
    x = jax.random.normal(kx, (2, 8, latent_dims), dtype=jnp.float32)
    out = feedforward_nn_decoder_forward(x, weights, biases, activations)
    jax.block_until_ready(out)
    assert out.shape == (2, 8, observed_dims)
    ref = _reference_forward(x, weights, biases, activations)
    assert bool(jnp.allclose(out, ref, atol=1e-5, rtol=1e-5))

    # Case 2: ragged row count -> plain path with a partial (masked) last grid block.
    key, kx2 = jax.random.split(key)
    x_ragged = jax.random.normal(kx2, (3, 7, latent_dims), dtype=jnp.float32)
    out2 = feedforward_nn_decoder_forward(x_ragged, weights, biases, activations)
    jax.block_until_ready(out2)
    assert out2.shape == (3, 7, observed_dims)
    ref2 = _reference_forward(x_ragged, weights, biases, activations)
    assert bool(jnp.allclose(out2, ref2, atol=1e-5, rtol=1e-5))

    print("KERNEL_OK")
</pallas_src>

<mosaic_0001>
module attributes {stable_mosaic.version = 11 : i64} {
  func.func @kernel(%arg0: i32, %arg1: memref<2x64xf32, #tpu.memory_space<vmem>>, %arg2: memref<64x256xf32, #tpu.memory_space<vmem>>, %arg3: memref<1x256xf32, #tpu.memory_space<vmem>>, %arg4: memref<256x256xf32, #tpu.memory_space<vmem>>, %arg5: memref<1x256xf32, #tpu.memory_space<vmem>>, %arg6: memref<256x128xf32, #tpu.memory_space<vmem>>, %arg7: memref<1x128xf32, #tpu.memory_space<vmem>>, %arg8: memref<2x128xf32, #tpu.memory_space<vmem>>) attributes {dimension_semantics = [#tpu.dimension_semantics<parallel>], iteration_bounds = array<i64: 1>, scalar_prefetch = 0 : i64, scratch_operands = 0 : i64, tpu.core_type = #tpu.core_type<tc>, window_params = [{transform_indices = @transform_0, window_bounds = array<i64: 2, 64>}, {pipeline_mode = #tpu.pipeline_mode<synchronous>, transform_indices = @transform_1, window_bounds = array<i64: 64, 256>}, {pipeline_mode = #tpu.pipeline_mode<synchronous>, transform_indices = @transform_2, window_bounds = array<i64: 1, 256>}, {pipeline_mode = #tpu.pipeline_mode<synchronous>, transform_indices = @transform_3, window_bounds = array<i64: 256, 256>}, {pipeline_mode = #tpu.pipeline_mode<synchronous>, transform_indices = @transform_4, window_bounds = array<i64: 1, 256>}, {pipeline_mode = #tpu.pipeline_mode<synchronous>, transform_indices = @transform_5, window_bounds = array<i64: 256, 128>}, {pipeline_mode = #tpu.pipeline_mode<synchronous>, transform_indices = @transform_6, window_bounds = array<i64: 1, 128>}, {transform_indices = @transform_7, window_bounds = array<i64: 2, 128>}]} {
    %c0 = arith.constant 0 : index
    %c0_0 = arith.constant 0 : index
    %0 = vector.load %arg1[%c0, %c0_0] : memref<2x64xf32, #tpu.memory_space<vmem>>, vector<2x64xf32>
    %c0_1 = arith.constant 0 : index
    %c0_2 = arith.constant 0 : index
    %1 = vector.load %arg2[%c0_1, %c0_2] : memref<64x256xf32, #tpu.memory_space<vmem>>, vector<64x256xf32>
    %c0_3 = arith.constant 0 : index
    %c0_4 = arith.constant 0 : index
    %2 = vector.load %arg3[%c0_3, %c0_4] : memref<1x256xf32, #tpu.memory_space<vmem>>, vector<1x256xf32>
    %cst = arith.constant dense<0.000000e+00> : vector<2x256xf32>
    %3 = tpu.matmul %0, %1, %cst {dimension_numbers = #tpu.dot_dimension_numbers<[1], [0], [0], [1], [0, 0, 1, 1], [], []>, precision = #tpu.contract_precision<fp32>} : vector<2x64xf32>, vector<64x256xf32>, vector<2x256xf32> -> vector<2x256xf32>
    %4 = vector.broadcast %2 : vector<1x256xf32> to vector<2x256xf32>
    %5 = arith.addf %3, %4 : vector<2x256xf32>
    %6 = math.tanh %5 : vector<2x256xf32>
    %c0_5 = arith.constant 0 : index
    %c0_6 = arith.constant 0 : index
    %7 = vector.load %arg4[%c0_5, %c0_6] : memref<256x256xf32, #tpu.memory_space<vmem>>, vector<256x256xf32>
    %c0_7 = arith.constant 0 : index
    %c0_8 = arith.constant 0 : index
    %8 = vector.load %arg5[%c0_7, %c0_8] : memref<1x256xf32, #tpu.memory_space<vmem>>, vector<1x256xf32>
    %cst_9 = arith.constant dense<0.000000e+00> : vector<2x256xf32>
    %9 = tpu.matmul %6, %7, %cst_9 {dimension_numbers = #tpu.dot_dimension_numbers<[1], [0], [0], [1], [0, 0, 1, 1], [], []>, precision = #tpu.contract_precision<fp32>} : vector<2x256xf32>, vector<256x256xf32>, vector<2x256xf32> -> vector<2x256xf32>
    %10 = vector.broadcast %8 : vector<1x256xf32> to vector<2x256xf32>
    %11 = arith.addf %9, %10 : vector<2x256xf32>
    %cst_10 = arith.constant 0.000000e+00 : f32
    %12 = vector.broadcast %cst_10 : f32 to vector<2x256xf32>
    %13 = arith.maximumf %11, %12 : vector<2x256xf32>
    %c0_11 = arith.constant 0 : index
    %c0_12 = arith.constant 0 : index
    %14 = vector.load %arg6[%c0_11, %c0_12] : memref<256x128xf32, #tpu.memory_space<vmem>>, vector<256x128xf32>
    %c0_13 = arith.constant 0 : index
    %c0_14 = arith.constant 0 : index
    %15 = vector.load %arg7[%c0_13, %c0_14] : memref<1x128xf32, #tpu.memory_space<vmem>>, vector<1x128xf32>
    %cst_15 = arith.constant dense<0.000000e+00> : vector<2x128xf32>
    %16 = tpu.matmul %13, %14, %cst_15 {dimension_numbers = #tpu.dot_dimension_numbers<[1], [0], [0], [1], [0, 0, 1, 1], [], []>, precision = #tpu.contract_precision<fp32>} : vector<2x256xf32>, vector<256x128xf32>, vector<2x128xf32> -> vector<2x128xf32>
    %17 = vector.broadcast %15 : vector<1x128xf32> to vector<2x128xf32>
    %18 = arith.addf %16, %17 : vector<2x128xf32>
    %c0_16 = arith.constant 0 : index
    %c0_17 = arith.constant 0 : index
    %19 = vector.load %arg8[%c0_16, %c0_17] : memref<2x128xf32, #tpu.memory_space<vmem>>, vector<2x128xf32>
    tpu.vector_store %arg8[%c0_16, %c0_17], %18 {strides = array<i32>} : memref<2x128xf32, #tpu.memory_space<vmem>>, vector<2x128xf32>,
    return
  }
  func.func @transform_0(%arg0: i32) -> (i32, i32) {
    %c0_i32 = arith.constant 0 : i32
    %c0_i32_0 = arith.constant 0 : i32
    return %arg0, %c0_i32 : i32, i32
  }
  func.func @transform_1(%arg0: i32) -> (i32, i32) {
    %c0_i32 = arith.constant 0 : i32
    %c0_i32_0 = arith.constant 0 : i32
    %c0_i32_1 = arith.constant 0 : i32
    return %c0_i32, %c0_i32_0 : i32, i32
  }
  func.func @transform_2(%arg0: i32) -> (i32, i32) {
    %c0_i32 = arith.constant 0 : i32
    %c0_i32_0 = arith.constant 0 : i32
    %c0_i32_1 = arith.constant 0 : i32
    return %c0_i32, %c0_i32_0 : i32, i32
  }
  func.func @transform_3(%arg0: i32) -> (i32, i32) {
    %c0_i32 = arith.constant 0 : i32
    %c0_i32_0 = arith.constant 0 : i32
    %c0_i32_1 = arith.constant 0 : i32
    return %c0_i32, %c0_i32_0 : i32, i32
  }
  func.func @transform_4(%arg0: i32) -> (i32, i32) {
    %c0_i32 = arith.constant 0 : i32
    %c0_i32_0 = arith.constant 0 : i32
    %c0_i32_1 = arith.constant 0 : i32
    return %c0_i32, %c0_i32_0 : i32, i32
  }
  func.func @transform_5(%arg0: i32) -> (i32, i32) {
    %c0_i32 = arith.constant 0 : i32
    %c0_i32_0 = arith.constant 0 : i32
    %c0_i32_1 = arith.constant 0 : i32
    return %c0_i32, %c0_i32_0 : i32, i32
  }
  func.func @transform_6(%arg0: i32) -> (i32, i32) {
    %c0_i32 = arith.constant 0 : i32
    %c0_i32_0 = arith.constant 0 : i32
    %c0_i32_1 = arith.constant 0 : i32
    return %c0_i32, %c0_i32_0 : i32, i32
  }
  func.func @transform_7(%arg0: i32) -> (i32, i32) {
    %c0_i32 = arith.constant 0 : i32
    %c0_i32_0 = arith.constant 0 : i32
    return %arg0, %c0_i32 : i32, i32
  }
}

</mosaic_0001>

<llo_original>
// kernel: tpu_custom_call.1
$region0: #{tpu_custom_call.1}
  #allocation0 [shape = 'u32[]', space=smem, size = 0x4, offset = 0x4, fixed_abs, tag = 'smem constant byte address 0x4 - core index']
  #allocation1 [shape = 'u32[144,128]{1,0:T(1,128)}', space=vmem, size = 0x12000, scoped, tag = 'internal scratch']
  %s0 = inlined_call_operand.hbm [shape: f32[2,64], index: 0, kind: input, shape index: {}]
  %s1 = inlined_call_operand.hbm [shape: f32[64,256], index: 1, kind: input, shape index: {}]
  %s2 = inlined_call_operand.vmem [shape: f32[1,256], index: 2, kind: input, shape index: {}]
  %s3 = inlined_call_operand.hbm [shape: f32[256,256], index: 3, kind: input, shape index: {}]
  %s4 = inlined_call_operand.vmem [shape: f32[1,256], index: 4, kind: input, shape index: {}]
  %s5 = inlined_call_operand.hbm [shape: f32[256,128], index: 5, kind: input, shape index: {}]
  %s6 = inlined_call_operand.vmem [shape: f32[1,128], index: 6, kind: input, shape index: {}]
  %s7 = inlined_call_operand.hbm [shape: f32[2,128], index: 7, kind: output, shape index: {}]
  %s8 = sld [smem:[#allocation0]]
  $region54: #{tpu_custom_call.1} parent=0
    _
  %s10 = ssub.s32 1, %s8
  %s11 = scalar_select 0, %s10, %s8
  $region1: #{tpu_custom_call.1} parent=0
    #allocation2 [shape = 'u8[1024]{0}', space=vmem, size = 0x400, scoped, tag = 'input window, operand 0, single buffered']
    #allocation3 [shape = 's32[1]{0}', space=sflag, size = 0x4, scoped, tag = 'scoped memory for tpu_custom_call.1']
    #allocation4 [shape = 's32[1]{0}', space=sflag, size = 0x4, scoped, tag = 'scoped memory for tpu_custom_call.1']
    #allocation5 [shape = 'u8[65536]{0}', space=vmem, size = 0x10000, scoped, tag = 'input window, operand 1, single buffered']
    #allocation6 [shape = 's32[1]{0}', space=sflag, size = 0x4, scoped, tag = 'scoped memory for tpu_custom_call.1']
    #allocation7 [shape = 'u8[262144]{0}', space=vmem, size = 0x40000, scoped, tag = 'input window, operand 3, single buffered']
    #allocation8 [shape = 'u8[131072]{0}', space=vmem, size = 0x20000, scoped, tag = 'input window, operand 5, single buffered']
    #allocation9 [shape = 's32[1]{0}', space=sflag, size = 0x4, scoped, tag = 'scoped memory for tpu_custom_call.1']
    #allocation10 [shape = 'u8[1024]{0}', space=vmem, size = 0x400, scoped, tag = 'output window, operand 0, single buffered']
    %12 = vsyncpa [#allocation3], 0
    %13 = vsyncpa [#allocation6], 0
    %14 = vsyncpa [#allocation9], 0
    %15 = vsyncpa [#allocation4], 0
    // Predicated region
    $region2: #{tpu_custom_call.1} parent=1 // pred_check
      _
    $region3: #{tpu_custom_call.1} parent=1 // pred_check_branch
      %17 = sbr.rel (0) target = $region5
    $region4: #{tpu_custom_call.1} parent=1 // pred_region
      %s19 = ssub.s32 32, 32
      %20 = vsyncadd [#allocation3], %s19
      %s22 = sshll.u32 [#allocation2], 4
      %s23 = int_to_ptr.vmem [resolvable:$true] %s22
      %25 = dma.hbm_to_vmem [thread:$0]  %s0, 32, %s23, [#allocation3]
    $region5: #{tpu_custom_call.1} parent=1 // pred_fallthru
      _
    // Predicated region
    $region6: #{tpu_custom_call.1} parent=1 // pred_check
      _
    $region7: #{tpu_custom_call.1} parent=1 // pred_check_branch
      %27 = sbr.rel (0) target = $region9
    $region8: #{tpu_custom_call.1} parent=1 // pred_region
      %s29 = ssub.s32 2048, 2048
      %30 = vsyncadd [#allocation6], %s29
      %s31 = sshll.u32 [#allocation5], 4
      %s32 = int_to_ptr.vmem [resolvable:$true] %s31
      %37 = dma.hbm_to_vmem [thread:$0]  %s1, 2048, %s32, [#allocation6], 256, 256, 16
    $region9: #{tpu_custom_call.1} parent=1 // pred_fallthru
      _
    // Predicated region
    $region10: #{tpu_custom_call.1} parent=1 // pred_check
      _
    $region11: #{tpu_custom_call.1} parent=1 // pred_check_branch
      %39 = sbr.rel (0) target = $region13
    $region12: #{tpu_custom_call.1} parent=1 // pred_region
      _
    $region13: #{tpu_custom_call.1} parent=1 // pred_fallthru
      _
    // Predicated region
    $region14: #{tpu_custom_call.1} parent=1 // pred_check
      _
    $region15: #{tpu_custom_call.1} parent=1 // pred_check_branch
      %41 = sbr.rel (0) target = $region17
    $region16: #{tpu_custom_call.1} parent=1 // pred_region
      %s43 = ssub.s32 8192, 8192
      %44 = vsyncadd [#allocation6], %s43
      %s45 = sshll.u32 [#allocation7], 4
      %s46 = int_to_ptr.vmem [resolvable:$true] %s45
      %51 = dma.hbm_to_vmem [thread:$0]  %s3, 8192, %s46, [#allocation6], 256, 256, 16
    $region17: #{tpu_custom_call.1} parent=1 // pred_fallthru
      _
    // Predicated region
    $region18: #{tpu_custom_call.1} parent=1 // pred_check
      _
    $region19: #{tpu_custom_call.1} parent=1 // pred_check_branch
      %53 = sbr.rel (0) target = $region21
    $region20: #{tpu_custom_call.1} parent=1 // pred_region
      _
    $region21: #{tpu_custom_call.1} parent=1 // pred_fallthru
      _
    // Predicated region
    $region22: #{tpu_custom_call.1} parent=1 // pred_check
      _
    $region23: #{tpu_custom_call.1} parent=1 // pred_check_branch
      %55 = sbr.rel (0) target = $region25
    $region24: #{tpu_custom_call.1} parent=1 // pred_region
      %s57 = ssub.s32 4096, 4096
      %58 = vsyncadd [#allocation9], %s57
      %s59 = sshll.u32 [#allocation8], 4
      %s60 = int_to_ptr.vmem [resolvable:$true] %s59
      %65 = dma.hbm_to_vmem [thread:$0]  %s5, 4096, %s60, [#allocation9], 128, 128, 8
    $region25: #{tpu_custom_call.1} parent=1 // pred_fallthru
      _
    // Predicated region
    $region26: #{tpu_custom_call.1} parent=1 // pred_check
      _
    $region27: #{tpu_custom_call.1} parent=1 // pred_check_branch
      %67 = sbr.rel (0) target = $region29
    $region28: #{tpu_custom_call.1} parent=1 // pred_region
      _
    $region29: #{tpu_custom_call.1} parent=1 // pred_fallthru
      _
    // Predicated region
    $region30: #{tpu_custom_call.1} parent=1 // pred_check
      _
    $region31: #{tpu_custom_call.1} parent=1 // pred_check_branch
      %69 = sbr.rel (0) target = $region33
    $region32: #{tpu_custom_call.1} parent=1 // pred_region
      %70 = dma.done [#allocation3], 32
    $region33: #{tpu_custom_call.1} parent=1 // pred_fallthru
      _
    // Predicated region
    $region34: #{tpu_custom_call.1} parent=1 // pred_check
      _
    $region35: #{tpu_custom_call.1} parent=1 // pred_check_branch
      %72 = sbr.rel (0) target = $region37
    $region36: #{tpu_custom_call.1} parent=1 // pred_region
      %73 = dma.done [#allocation6], 2048
    $region37: #{tpu_custom_call.1} parent=1 // pred_fallthru
      _
    // Predicated region
    $region38: #{tpu_custom_call.1} parent=1 // pred_check
      _
    $region39: #{tpu_custom_call.1} parent=1 // pred_check_branch
      %75 = sbr.rel (0) target = $region41
    $region40: #{tpu_custom_call.1} parent=1 // pred_region
      %76 = dma.done [#allocation6], 8192
    $region41: #{tpu_custom_call.1} parent=1 // pred_fallthru
      _
    // Predicated region
    $region42: #{tpu_custom_call.1} parent=1 // pred_check
      _
    $region43: #{tpu_custom_call.1} parent=1 // pred_check_branch
      %78 = sbr.rel (0) target = $region45
    $region44: #{tpu_custom_call.1} parent=1 // pred_region
      %79 = dma.done [#allocation9], 4096
    $region45: #{tpu_custom_call.1} parent=1 // pred_fallthru
      _
    %v80 = vld [vmem:[#allocation2] sm:$0x3]
    %v81 = vld [vmem:[#allocation5] sm:$0xff]
    %v82 = vld [vmem:[#allocation5 + $0x8] sm:$0xff]
    %v83 = vld [vmem:[#allocation5 + $0x10] sm:$0xff]
    %v84 = vld [vmem:[#allocation5 + $0x18] sm:$0xff]
    %v85 = vld [vmem:[#allocation5 + $0x20] sm:$0xff]
    %v86 = vld [vmem:[#allocation5 + $0x28] sm:$0xff]
    %v87 = vld [vmem:[#allocation5 + $0x30] sm:$0xff]
    %v88 = vld [vmem:[#allocation5 + $0x38] sm:$0xff]
    %v89 = vld [vmem:[#allocation5 + $0x40] sm:$0xff]
    %v90 = vld [vmem:[#allocation5 + $0x48] sm:$0xff]
    %v91 = vld [vmem:[#allocation5 + $0x50] sm:$0xff]
    %v92 = vld [vmem:[#allocation5 + $0x58] sm:$0xff]
    %v93 = vld [vmem:[#allocation5 + $0x60] sm:$0xff]
    %v94 = vld [vmem:[#allocation5 + $0x68] sm:$0xff]
    %v95 = vld [vmem:[#allocation5 + $0x70] sm:$0xff]
    %v96 = vld [vmem:[#allocation5 + $0x78] sm:$0xff]
    %v97 = vld [vmem:[%s2] sm:$0x3]
    %v99 = vlaneseq
    %v100 = vshrl.u32 %v99, 7
    %v101 = vsub.s32 0, %v100
    %v102 = vrot.slane %v97, %v101
    %v103 = vlaneseq
    %v104 = vshrl.u32 %v103, 7
    %v105 = vsub.s32 1, %v104
    %v106 = vrot.slane %v97, %v105
    %vm109 = vcmask 523264
    %v111 = vsel %vm109, %v80, 0
    %v113 = vand.u32 %v82, 4294901760
    %114 = vmatprep.subr.mxu0 %v113
    %v115 = vand.u32 %v81, 4294901760
    %116 = vmatpush1.msra.mxu0 %v115
    %v117 = vand.u32 %v84, 4294901760
    %118 = vmatprep.subr.mxu0 %v117
    %v119 = vand.u32 %v83, 4294901760
    %120 = vmatpush1.msra.mxu0 %v119
    %v121 = vand.u32 %v86, 4294901760
    %122 = vmatprep.subr.mxu0 %v121
    %v123 = vand.u32 %v85, 4294901760
    %124 = vmatpush1.msra.mxu0 %v123
    %v125 = vand.u32 %v88, 4294901760
    %126 = vmatprep.subr.mxu0 %v125
    %v127 = vand.u32 %v87, 4294901760
    %128 = vmatpush1.msra.mxu0 %v127
    %v129 = vand.u32 %v90, 4294901760
    %130 = vmatprep.subr.mxu0 %v129
    %v131 = vand.u32 %v89, 4294901760
    %132 = vmatpush1.msra.mxu0 %v131
    %v133 = vand.u32 %v92, 4294901760
    %134 = vmatprep.subr.mxu0 %v133
    %v135 = vand.u32 %v91, 4294901760
    %136 = vmatpush1.msra.mxu0 %v135
    %v137 = vand.u32 %v94, 4294901760
    %138 = vmatprep.subr.mxu0 %v137
    %v139 = vand.u32 %v93, 4294901760
    %140 = vmatpush1.msra.mxu0 %v139
    %v141 = vand.u32 %v96, 4294901760
    %142 = vmatprep.subr.mxu0 %v141
    %v143 = vand.u32 %v95, 4294901760
    %144 = vmatpush1.msra.mxu0 %v143
    %145 = vmatprep.subr.mxu0 0.0
    %146 = vmatpush1.msra.mxu0 0.0
    %147 = vmatprep.subr.mxu0 0.0
    %148 = vmatpush1.msra.mxu0 0.0
    %149 = vmatprep.subr.mxu0 0.0
    %150 = vmatpush1.msra.mxu0 0.0
    %151 = vmatprep.subr.mxu0 0.0
    %152 = vmatpush1.msra.mxu0 0.0
    %153 = vmatprep.subr.mxu0 0.0
    %154 = vmatpush1.msra.mxu0 0.0
    %155 = vmatprep.subr.mxu0 0.0
    %156 = vmatpush1.msra.mxu0 0.0
    %157 = vmatprep.subr.mxu0 0.0
    %158 = vmatpush1.msra.mxu0 0.0
    %159 = vmatprep.subr.mxu0 0.0
    %160 = vmatpush1.msra.mxu0 0.0
    %161 = vmatprep.subr.mxu0 0.0
    %162 = vmatpush1.msra.mxu0 0.0
    %163 = vmatprep.subr.mxu0 0.0
    %164 = vmatpush1.msra.mxu0 0.0
    %165 = vmatprep.subr.mxu0 0.0
    %166 = vmatpush1.msra.mxu0 0.0
    %167 = vmatprep.subr.mxu0 0.0
    %168 = vmatpush1.msra.mxu0 0.0
    %169 = vmatprep.subr.mxu0 0.0
    %170 = vmatpush1.msra.mxu0 0.0
    %171 = vmatprep.subr.mxu0 0.0
    %172 = vmatpush1.msra.mxu0 0.0
    %173 = vmatprep.subr.mxu0 0.0
    %174 = vmatpush1.msra.mxu0 0.0
    %175 = vmatprep.subr.mxu0 0.0
    %176 = vmatpush1.msra.mxu0 0.0
    %177 = vmatprep.subr.mxu0 0.0
    %178 = vmatpush1.msra.mxu0 0.0
    %179 = vmatprep.subr.mxu0 0.0
    %180 = vmatpush1.msra.mxu0 0.0
    %181 = vmatprep.subr.mxu0 0.0
    %182 = vmatpush1.msra.mxu0 0.0
    %183 = vmatprep.subr.mxu0 0.0
    %184 = vmatpush1.msra.mxu0 0.0
    %185 = vmatprep.subr.mxu0 0.0
    %186 = vmatpush1.msra.mxu0 0.0
    %187 = vmatprep.subr.mxu0 0.0
    %188 = vmatpush1.msra.mxu0 0.0
    %189 = vmatprep.subr.mxu0 0.0
    %190 = vmatpush1.msra.mxu0 0.0
    %191 = vmatprep.subr.mxu0 0.0
    %192 = vmatpush1.msra.mxu0 0.0
    %193 = vmatprep.mubr.f32.mxu0 0.0
    %v194 = vand.u32 %v111, 4294901760
    %v195 = vsub.f32 %v111, %v194
    %v196 = vand.u32 %v195, 4294901760
    %v197 = vsub.f32 %v195, %v196
    %v198 = vand.u32 %v197, 4294901760
    %199 = vmatmul.mubr.f32.gmra.mrb[0].mxu0 %v198
    %v200 = vpop.f32.mrb[0].mxu0
    %v201 = vadd.f32 %v102, %v200
    %v202 = vpop.f32.mrb[0].mxu0
    %v203 = vadd.f32 %v106, %v202
    %204 = vdwg.mxu0
    %v205 = vand.u32 %v82, 4294901760
    %v206 = vsub.f32 %v82, %v205
    %v207 = vand.u32 %v206, 4294901760
    %v208 = vsub.f32 %v206, %v207
    %v209 = vand.u32 %v208, 4294901760
    %210 = vmatprep.subr.mxu0 %v209
    %v211 = vand.u32 %v81, 4294901760
    %v212 = vsub.f32 %v81, %v211
    %v213 = vand.u32 %v212, 4294901760
    %v214 = vsub.f32 %v212, %v213
    %v215 = vand.u32 %v214, 4294901760
    %216 = vmatpush1.msra.mxu0 %v215
    %v217 = vand.u32 %v84, 4294901760
    %v218 = vsub.f32 %v84, %v217
    %v219 = vand.u32 %v218, 4294901760
    %v220 = vsub.f32 %v218, %v219
    %v221 = vand.u32 %v220, 4294901760
    %222 = vmatprep.subr.mxu0 %v221
    %v223 = vand.u32 %v83, 4294901760
    %v224 = vsub.f32 %v83, %v223
    %v225 = vand.u32 %v224, 4294901760
    %v226 = vsub.f32 %v224, %v225
    %v227 = vand.u32 %v226, 4294901760
    %228 = vmatpush1.msra.mxu0 %v227
    %v229 = vand.u32 %v86, 4294901760
    %v230 = vsub.f32 %v86, %v229
    %v231 = vand.u32 %v230, 4294901760
    %v232 = vsub.f32 %v230, %v231
    %v233 = vand.u32 %v232, 4294901760
    %234 = vmatprep.subr.mxu0 %v233
    %v235 = vand.u32 %v85, 4294901760
    %v236 = vsub.f32 %v85, %v235
    %v237 = vand.u32 %v236, 4294901760
    %v238 = vsub.f32 %v236, %v237
    %v239 = vand.u32 %v238, 4294901760
    %240 = vmatpush1.msra.mxu0 %v239
    %v241 = vand.u32 %v88, 4294901760
    %v242 = vsub.f32 %v88, %v241
    %v243 = vand.u32 %v242, 4294901760
    %v244 = vsub.f32 %v242, %v243
    %v245 = vand.u32 %v244, 4294901760
    %246 = vmatprep.subr.mxu0 %v245
    %v247 = vand.u32 %v87, 4294901760
    %v248 = vsub.f32 %v87, %v247
    %v249 = vand.u32 %v248, 4294901760
    %v250 = vsub.f32 %v248, %v249
    %v251 = vand.u32 %v250, 4294901760
    %252 = vmatpush1.msra.mxu0 %v251
    %v253 = vand.u32 %v90, 4294901760
    %v254 = vsub.f32 %v90, %v253
    %v255 = vand.u32 %v254, 4294901760
    %v256 = vsub.f32 %v254, %v255
    %v257 = vand.u32 %v256, 4294901760
    %258 = vmatprep.subr.mxu0 %v257
    %v259 = vand.u32 %v89, 4294901760
    %v260 = vsub.f32 %v89, %v259
    %v261 = vand.u32 %v260, 4294901760
    %v262 = vsub.f32 %v260, %v261
    %v263 = vand.u32 %v262, 4294901760
    %264 = vmatpush1.msra.mxu0 %v263
    %v265 = vand.u32 %v92, 4294901760
    %v266 = vsub.f32 %v92, %v265
    %v267 = vand.u32 %v266, 4294901760
    %v268 = vsub.f32 %v266, %v267
    %v269 = vand.u32 %v268, 4294901760
    %270 = vmatprep.subr.mxu0 %v269
    %v271 = vand.u32 %v91, 4294901760
    %v272 = vsub.f32 %v91, %v271
    %v273 = vand.u32 %v272, 4294901760
    %v274 = vsub.f32 %v272, %v273
    %v275 = vand.u32 %v274, 4294901760
    %276 = vmatpush1.msra.mxu0 %v275
    %v277 = vand.u32 %v94, 4294901760
    %v278 = vsub.f32 %v94, %v277
    %v279 = vand.u32 %v278, 4294901760
    %v280 = vsub.f32 %v278, %v279
    %v281 = vand.u32 %v280, 4294901760
    %282 = vmatprep.subr.mxu0 %v281
    %v283 = vand.u32 %v93, 4294901760
    %v284 = vsub.f32 %v93, %v283
    %v285 = vand.u32 %v284, 4294901760
    %v286 = vsub.f32 %v284, %v285
    %v287 = vand.u32 %v286, 4294901760
    %288 = vmatpush1.msra.mxu0 %v287
    %v289 = vand.u32 %v96, 4294901760
    %v290 = vsub.f32 %v96, %v289
    %v291 = vand.u32 %v290, 4294901760
    %v292 = vsub.f32 %v290, %v291
    %v293 = vand.u32 %v292, 4294901760
    %294 = vmatprep.subr.mxu0 %v293
    %v295 = vand.u32 %v95, 4294901760
    %v296 = vsub.f32 %v95, %v295
    %v297 = vand.u32 %v296, 4294901760
    %v298 = vsub.f32 %v296, %v297
    %v299 = vand.u32 %v298, 4294901760
    %300 = vmatpush1.msra.mxu0 %v299
    %301 = vmatprep.subr.mxu0 0.0
    %302 = vmatpush1.msra.mxu0 0.0
    %303 = vmatprep.subr.mxu0 0.0
    %304 = vmatpush1.msra.mxu0 0.0
    %305 = vmatprep.subr.mxu0 0.0
    %306 = vmatpush1.msra.mxu0 0.0
    %307 = vmatprep.subr.mxu0 0.0
    %308 = vmatpush1.msra.mxu0 0.0
    %309 = vmatprep.subr.mxu0 0.0
    %310 = vmatpush1.msra.mxu0 0.0
    %311 = vmatprep.subr.mxu0 0.0
    %312 = vmatpush1.msra.mxu0 0.0
    %313 = vmatprep.subr.mxu0 0.0
    %314 = vmatpush1.msra.mxu0 0.0
    %315 = vmatprep.subr.mxu0 0.0
    %316 = vmatpush1.msra.mxu0 0.0
    %317 = vmatprep.subr.mxu0 0.0
    %318 = vmatpush1.msra.mxu0 0.0
    %319 = vmatprep.subr.mxu0 0.0
    %320 = vmatpush1.msra.mxu0 0.0
    %321 = vmatprep.subr.mxu0 0.0
    %322 = vmatpush1.msra.mxu0 0.0
    %323 = vmatprep.subr.mxu0 0.0
    %324 = vmatpush1.msra.mxu0 0.0
    %325 = vmatprep.subr.mxu0 0.0
    %326 = vmatpush1.msra.mxu0 0.0
    %327 = vmatprep.subr.mxu0 0.0
    %328 = vmatpush1.msra.mxu0 0.0
    %329 = vmatprep.subr.mxu0 0.0
    %330 = vmatpush1.msra.mxu0 0.0
    %331 = vmatprep.subr.mxu0 0.0
    %332 = vmatpush1.msra.mxu0 0.0
    %333 = vmatprep.subr.mxu0 0.0
    %334 = vmatpush1.msra.mxu0 0.0
    %335 = vmatprep.subr.mxu0 0.0
    %336 = vmatpush1.msra.mxu0 0.0
    %337 = vmatprep.subr.mxu0 0.0
    %338 = vmatpush1.msra.mxu0 0.0
    %339 = vmatprep.subr.mxu0 0.0
    %340 = vmatpush1.msra.mxu0 0.0
    %341 = vmatprep.subr.mxu0 0.0
    %342 = vmatpush1.msra.mxu0 0.0
    %343 = vmatprep.subr.mxu0 0.0
    %344 = vmatpush1.msra.mxu0 0.0
    %345 = vmatprep.subr.mxu0 0.0
    %346 = vmatpush1.msra.mxu0 0.0
    %347 = vmatprep.subr.mxu0 0.0
    %348 = vmatpush1.msra.mxu0 0.0
    %349 = vmatprep.mubr.f32.mxu0 0.0
    %v350 = vand.u32 %v111, 4294901760
    %351 = vmatmul.mubr.f32.gmra.mrb[0].mxu0 %v350
    %v352 = vpop.f32.mrb[0].mxu0
    %v353 = vadd.f32 %v201, %v352
    %v354 = vpop.f32.mrb[0].mxu0
    %v355 = vadd.f32 %v203, %v354
    %356 = vdwg.mxu0
    %v357 = vand.u32 %v82, 4294901760
    %v358 = vsub.f32 %v82, %v357
    %359 = vmatprep.subr.mxu0 %v358
    %v360 = vand.u32 %v81, 4294901760
    %v361 = vsub.f32 %v81, %v360
    %362 = vmatpush1.msra.mxu0 %v361
    %v363 = vand.u32 %v84, 4294901760
    %v364 = vsub.f32 %v84, %v363
    %365 = vmatprep.subr.mxu0 %v364
    %v366 = vand.u32 %v83, 4294901760
    %v367 = vsub.f32 %v83, %v366
    %368 = vmatpush1.msra.mxu0 %v367
    %v369 = vand.u32 %v86, 4294901760
    %v370 = vsub.f32 %v86, %v369
    %371 = vmatprep.subr.mxu0 %v370
    %v372 = vand.u32 %v85, 4294901760
    %v373 = vsub.f32 %v85, %v372
    %374 = vmatpush1.msra.mxu0 %v373
    %v375 = vand.u32 %v88, 4294901760
    %v376 = vsub.f32 %v88, %v375
    %377 = vmatprep.subr.mxu0 %v376
    %v378 = vand.u32 %v87, 4294901760
    %v379 = vsub.f32 %v87, %v378
    %380 = vmatpush1.msra.mxu0 %v379
    %v381 = vand.u32 %v90, 4294901760
    %v382 = vsub.f32 %v90, %v381
    %383 = vmatprep.subr.mxu0 %v382
    %v384 = vand.u32 %v89, 4294901760
    %v385 = vsub.f32 %v89, %v384
    %386 = vmatpush1.msra.mxu0 %v385
    %v387 = vand.u32 %v92, 4294901760
    %v388 = vsub.f32 %v92, %v387
    %389 = vmatprep.subr.mxu0 %v388
    %v390 = vand.u32 %v91, 4294901760
    %v391 = vsub.f32 %v91, %v390
    %392 = vmatpush1.msra.mxu0 %v391
    %v393 = vand.u32 %v94, 4294901760
    %v394 = vsub.f32 %v94, %v393
    %395 = vmatprep.subr.mxu0 %v394
    %v396 = vand.u32 %v93, 4294901760
    %v397 = vsub.f32 %v93, %v396
    %398 = vmatpush1.msra.mxu0 %v397
    %v399 = vand.u32 %v96, 4294901760
    %v400 = vsub.f32 %v96, %v399
    %401 = vmatprep.subr.mxu0 %v400
    %v402 = vand.u32 %v95, 4294901760
    %v403 = vsub.f32 %v95, %v402
    %404 = vmatpush1.msra.mxu0 %v403
    %405 = vmatprep.subr.mxu0 0.0
    %406 = vmatpush1.msra.mxu0 0.0
    %407 = vmatprep.subr.mxu0 0.0
    %408 = vmatpush1.msra.mxu0 0.0
    %409 = vmatprep.subr.mxu0 0.0
    %410 = vmatpush1.msra.mxu0 0.0
    %411 = vmatprep.subr.mxu0 0.0
    %412 = vmatpush1.msra.mxu0 0.0
    %413 = vmatprep.subr.mxu0 0.0
    %414 = vmatpush1.msra.mxu0 0.0
    %415 = vmatprep.subr.mxu0 0.0
    %416 = vmatpush1.msra.mxu0 0.0
    %417 = vmatprep.subr.mxu0 0.0
    %418 = vmatpush1.msra.mxu0 0.0
    %419 = vmatprep.subr.mxu0 0.0
    %420 = vmatpush1.msra.mxu0 0.0
    %421 = vmatprep.subr.mxu0 0.0
    %422 = vmatpush1.msra.mxu0 0.0
    %423 = vmatprep.subr.mxu0 0.0
    %424 = vmatpush1.msra.mxu0 0.0
    %425 = vmatprep.subr.mxu0 0.0
    %426 = vmatpush1.msra.mxu0 0.0
    %427 = vmatprep.subr.mxu0 0.0
    %428 = vmatpush1.msra.mxu0 0.0
    %429 = vmatprep.subr.mxu0 0.0
    %430 = vmatpush1.msra.mxu0 0.0
    %431 = vmatprep.subr.mxu0 0.0
    %432 = vmatpush1.msra.mxu0 0.0
    %433 = vmatprep.subr.mxu0 0.0
    %434 = vmatpush1.msra.mxu0 0.0
    %435 = vmatprep.subr.mxu0 0.0
    %436 = vmatpush1.msra.mxu0 0.0
    %437 = vmatprep.subr.mxu0 0.0
    %438 = vmatpush1.msra.mxu0 0.0
    %439 = vmatprep.subr.mxu0 0.0
    %440 = vmatpush1.msra.mxu0 0.0
    %441 = vmatprep.subr.mxu0 0.0
    %442 = vmatpush1.msra.mxu0 0.0
    %443 = vmatprep.subr.mxu0 0.0
    %444 = vmatpush1.msra.mxu0 0.0
    %445 = vmatprep.subr.mxu0 0.0
    %446 = vmatpush1.msra.mxu0 0.0
    %447 = vmatprep.subr.mxu0 0.0
    %448 = vmatpush1.msra.mxu0 0.0
    %449 = vmatprep.subr.mxu0 0.0
    %450 = vmatpush1.msra.mxu0 0.0
    %451 = vmatprep.subr.mxu0 0.0
    %452 = vmatpush1.msra.mxu0 0.0
    %453 = vmatprep.mubr.f32.mxu0 0.0
    %v454 = vand.u32 %v111, 4294901760
    %v455 = vsub.f32 %v111, %v454
    %456 = vmatmul.mubr.f32.gmra.mrb[0].mxu0 %v455
    %v457 = vpop.f32.mrb[0].mxu0
    %v458 = vadd.f32 %v353, %v457
    %v459 = vpop.f32.mrb[0].mxu0
    %v460 = vadd.f32 %v355, %v459
    %461 = vdwg.mxu0
    %v462 = vand.u32 %v82, 4294901760
    %463 = vmatprep.subr.mxu0 %v462
    %v464 = vand.u32 %v81, 4294901760
    %465 = vmatpush1.msra.mxu0 %v464
    %v466 = vand.u32 %v84, 4294901760
    %467 = vmatprep.subr.mxu0 %v466
    %v468 = vand.u32 %v83, 4294901760
    %469 = vmatpush1.msra.mxu0 %v468
    %v470 = vand.u32 %v86, 4294901760
    %471 = vmatprep.subr.mxu0 %v470
    %v472 = vand.u32 %v85, 4294901760
    %473 = vmatpush1.msra.mxu0 %v472
    %v474 = vand.u32 %v88, 4294901760
    %475 = vmatprep.subr.mxu0 %v474
    %v476 = vand.u32 %v87, 4294901760
    %477 = vmatpush1.msra.mxu0 %v476
    %v478 = vand.u32 %v90, 4294901760
    %479 = vmatprep.subr.mxu0 %v478
    %v480 = vand.u32 %v89, 4294901760
    %481 = vmatpush1.msra.mxu0 %v480
    %v482 = vand.u32 %v92, 4294901760
    %483 = vmatprep.subr.mxu0 %v482
    %v484 = vand.u32 %v91, 4294901760
    %485 = vmatpush1.msra.mxu0 %v484
    %v486 = vand.u32 %v94, 4294901760
    %487 = vmatprep.subr.mxu0 %v486
    %v488 = vand.u32 %v93, 4294901760
    %489 = vmatpush1.msra.mxu0 %v488
    %v490 = vand.u32 %v96, 4294901760
    %491 = vmatprep.subr.mxu0 %v490
    %v492 = vand.u32 %v95, 4294901760
    %493 = vmatpush1.msra.mxu0 %v492
    %494 = vmatprep.subr.mxu0 0.0
    %495 = vmatpush1.msra.mxu0 0.0
    %496 = vmatprep.subr.mxu0 0.0
    %497 = vmatpush1.msra.mxu0 0.0
    %498 = vmatprep.subr.mxu0 0.0
    %499 = vmatpush1.msra.mxu0 0.0
    %500 = vmatprep.subr.mxu0 0.0
    %501 = vmatpush1.msra.mxu0 0.0
    %502 = vmatprep.subr.mxu0 0.0
    %503 = vmatpush1.msra.mxu0 0.0
    %504 = vmatprep.subr.mxu0 0.0
    %505 = vmatpush1.msra.mxu0 0.0
    %506 = vmatprep.subr.mxu0 0.0
    %507 = vmatpush1.msra.mxu0 0.0
    %508 = vmatprep.subr.mxu0 0.0
    %509 = vmatpush1.msra.mxu0 0.0
    %510 = vmatprep.subr.mxu0 0.0
    %511 = vmatpush1.msra.mxu0 0.0
    %512 = vmatprep.subr.mxu0 0.0
    %513 = vmatpush1.msra.mxu0 0.0
    %514 = vmatprep.subr.mxu0 0.0
    %515 = vmatpush1.msra.mxu0 0.0
    %516 = vmatprep.subr.mxu0 0.0
    %517 = vmatpush1.msra.mxu0 0.0
    %518 = vmatprep.subr.mxu0 0.0
    %519 = vmatpush1.msra.mxu0 0.0
    %520 = vmatprep.subr.mxu0 0.0
    %521 = vmatpush1.msra.mxu0 0.0
    %522 = vmatprep.subr.mxu0 0.0
    %523 = vmatpush1.msra.mxu0 0.0
    %524 = vmatprep.subr.mxu0 0.0
    %525 = vmatpush1.msra.mxu0 0.0
    %526 = vmatprep.subr.mxu0 0.0
    %527 = vmatpush1.msra.mxu0 0.0
    %528 = vmatprep.subr.mxu0 0.0
    %529 = vmatpush1.msra.mxu0 0.0
    %530 = vmatprep.subr.mxu0 0.0
    %531 = vmatpush1.msra.mxu0 0.0
    %532 = vmatprep.subr.mxu0 0.0
    %533 = vmatpush1.msra.mxu0 0.0
    %534 = vmatprep.subr.mxu0 0.0
    %535 = vmatpush1.msra.mxu0 0.0
    %536 = vmatprep.subr.mxu0 0.0
    %537 = vmatpush1.msra.mxu0 0.0
    %538 = vmatprep.subr.mxu0 0.0
    %539 = vmatpush1.msra.mxu0 0.0
    %540 = vmatprep.subr.mxu0 0.0
    %541 = vmatpush1.msra.mxu0 0.0
    %542 = vmatprep.mubr.f32.mxu0 0.0
    %v543 = vand.u32 %v111, 4294901760
    %v544 = vsub.f32 %v111, %v543
    %v545 = vand.u32 %v544, 4294901760
    %546 = vmatmul.mubr.f32.gmra.mrb[0].mxu0 %v545
    %v547 = vpop.f32.mrb[0].mxu0
    %v548 = vadd.f32 %v458, %v547
    %v549 = vpop.f32.mrb[0].mxu0
    %v550 = vadd.f32 %v460, %v549
    %551 = vdwg.mxu0
    %v552 = vand.u32 %v82, 4294901760
    %v553 = vsub.f32 %v82, %v552
    %v554 = vand.u32 %v553, 4294901760
    %555 = vmatprep.subr.mxu0 %v554
    %v556 = vand.u32 %v81, 4294901760
    %v557 = vsub.f32 %v81, %v556
    %v558 = vand.u32 %v557, 4294901760
    %559 = vmatpush1.msra.mxu0 %v558
    %v560 = vand.u32 %v84, 4294901760
    %v561 = vsub.f32 %v84, %v560
    %v562 = vand.u32 %v561, 4294901760
    %563 = vmatprep.subr.mxu0 %v562
    %v564 = vand.u32 %v83, 4294901760
    %v565 = vsub.f32 %v83, %v564
    %v566 = vand.u32 %v565, 4294901760
    %567 = vmatpush1.msra.mxu0 %v566
    %v568 = vand.u32 %v86, 4294901760
    %v569 = vsub.f32 %v86, %v568
    %v570 = vand.u32 %v569, 4294901760
    %571 = vmatprep.subr.mxu0 %v570
    %v572 = vand.u32 %v85, 4294901760
    %v573 = vsub.f32 %v85, %v572
    %v574 = vand.u32 %v573, 4294901760
    %575 = vmatpush1.msra.mxu0 %v574
    %v576 = vand.u32 %v88, 4294901760
    %v577 = vsub.f32 %v88, %v576
    %v578 = vand.u32 %v577, 4294901760
    %579 = vmatprep.subr.mxu0 %v578
    %v580 = vand.u32 %v87, 4294901760
    %v581 = vsub.f32 %v87, %v580
    %v582 = vand.u32 %v581, 4294901760
    %583 = vmatpush1.msra.mxu0 %v582
    %v584 = vand.u32 %v90, 4294901760
    %v585 = vsub.f32 %v90, %v584
    %v586 = vand.u32 %v585, 4294901760
    %587 = vmatprep.subr.mxu0 %v586
    %v588 = vand.u32 %v89, 4294901760
    %v589 = vsub.f32 %v89, %v588
    %v590 = vand.u32 %v589, 4294901760
    %591 = vmatpush1.msra.mxu0 %v590
    %v592 = vand.u32 %v92, 4294901760
    %v593 = vsub.f32 %v92, %v592
    %v594 = vand.u32 %v593, 4294901760
    %595 = vmatprep.subr.mxu0 %v594
    %v596 = vand.u32 %v91, 4294901760
    %v597 = vsub.f32 %v91, %v596
    %v598 = vand.u32 %v597, 4294901760
    %599 = vmatpush1.msra.mxu0 %v598
    %v600 = vand.u32 %v94, 4294901760
    %v601 = vsub.f32 %v94, %v600
    %v602 = vand.u32 %v601, 4294901760
    %603 = vmatprep.subr.mxu0 %v602
    %v604 = vand.u32 %v93, 4294901760
    %v605 = vsub.f32 %v93, %v604
    %v606 = vand.u32 %v605, 4294901760
    %607 = vmatpush1.msra.mxu0 %v606
    %v608 = vand.u32 %v96, 4294901760
    %v609 = vsub.f32 %v96, %v608
    %v610 = vand.u32 %v609, 4294901760
    %611 = vmatprep.subr.mxu0 %v610
    %v612 = vand.u32 %v95, 4294901760
    %v613 = vsub.f32 %v95, %v612
    %v614 = vand.u32 %v613, 4294901760
    %615 = vmatpush1.msra.mxu0 %v614
    %616 = vmatprep.subr.mxu0 0.0
    %617 = vmatpush1.msra.mxu0 0.0
    %618 = vmatprep.subr.mxu0 0.0
    %619 = vmatpush1.msra.mxu0 0.0
    %620 = vmatprep.subr.mxu0 0.0
    %621 = vmatpush1.msra.mxu0 0.0
    %622 = vmatprep.subr.mxu0 0.0
    %623 = vmatpush1.msra.mxu0 0.0
    %624 = vmatprep.subr.mxu0 0.0
    %625 = vmatpush1.msra.mxu0 0.0
    %626 = vmatprep.subr.mxu0 0.0
    %627 = vmatpush1.msra.mxu0 0.0
    %628 = vmatprep.subr.mxu0 0.0
    %629 = vmatpush1.msra.mxu0 0.0
    %630 = vmatprep.subr.mxu0 0.0
    %631 = vmatpush1.msra.mxu0 0.0
    %632 = vmatprep.subr.mxu0 0.0
    %633 = vmatpush1.msra.mxu0 0.0
    %634 = vmatprep.subr.mxu0 0.0
    %635 = vmatpush1.msra.mxu0 0.0
    %636 = vmatprep.subr.mxu0 0.0
    %637 = vmatpush1.msra.mxu0 0.0
    %638 = vmatprep.subr.mxu0 0.0
    %639 = vmatpush1.msra.mxu0 0.0
    %640 = vmatprep.subr.mxu0 0.0
    %641 = vmatpush1.msra.mxu0 0.0
    %642 = vmatprep.subr.mxu0 0.0
    %643 = vmatpush1.msra.mxu0 0.0
    %644 = vmatprep.subr.mxu0 0.0
    %645 = vmatpush1.msra.mxu0 0.0
    %646 = vmatprep.subr.mxu0 0.0
    %647 = vmatpush1.msra.mxu0 0.0
    %648 = vmatprep.subr.mxu0 0.0
    %649 = vmatpush1.msra.mxu0 0.0
    %650 = vmatprep.subr.mxu0 0.0
    %651 = vmatpush1.msra.mxu0 0.0
    %652 = vmatprep.subr.mxu0 0.0
    %653 = vmatpush1.msra.mxu0 0.0
    %654 = vmatprep.subr.mxu0 0.0
    %655 = vmatpush1.msra.mxu0 0.0
    %656 = vmatprep.subr.mxu0 0.0
    %657 = vmatpush1.msra.mxu0 0.0
    %658 = vmatprep.subr.mxu0 0.0
    %659 = vmatpush1.msra.mxu0 0.0
    %660 = vmatprep.subr.mxu0 0.0
    %661 = vmatpush1.msra.mxu0 0.0
    %662 = vmatprep.subr.mxu0 0.0
    %663 = vmatpush1.msra.mxu0 0.0
    %664 = vmatprep.mubr.f32.mxu0 0.0
    %v665 = vand.u32 %v111, 4294901760
    %666 = vmatmul.mubr.f32.gmra.mrb[0].mxu0 %v665
    %v667 = vpop.f32.mrb[0].mxu0
    %v668 = vadd.f32 %v548, %v667
    %v669 = vpop.f32.mrb[0].mxu0
    %v670 = vadd.f32 %v550, %v669
    %671 = vdwg.mxu0
    %v672 = vand.u32 %v82, 4294901760
    %673 = vmatprep.subr.mxu0 %v672
    %v674 = vand.u32 %v81, 4294901760
    %675 = vmatpush1.msra.mxu0 %v674
    %v676 = vand.u32 %v84, 4294901760
    %677 = vmatprep.subr.mxu0 %v676
    %v678 = vand.u32 %v83, 4294901760
    %679 = vmatpush1.msra.mxu0 %v678
    %v680 = vand.u32 %v86, 4294901760
    %681 = vmatprep.subr.mxu0 %v680
    %v682 = vand.u32 %v85, 4294901760
    %683 = vmatpush1.msra.mxu0 %v682
    %v684 = vand.u32 %v88, 4294901760
    %685 = vmatprep.subr.mxu0 %v684
    %v686 = vand.u32 %v87, 4294901760
    %687 = vmatpush1.msra.mxu0 %v686
    %v688 = vand.u32 %v90, 4294901760
    %689 = vmatprep.subr.mxu0 %v688
    %v690 = vand.u32 %v89, 4294901760
    %691 = vmatpush1.msra.mxu0 %v690
    %v692 = vand.u32 %v92, 4294901760
    %693 = vmatprep.subr.mxu0 %v692
    %v694 = vand.u32 %v91, 4294901760
    %695 = vmatpush1.msra.mxu0 %v694
    %v696 = vand.u32 %v94, 4294901760
    %697 = vmatprep.subr.mxu0 %v696
    %v698 = vand.u32 %v93, 4294901760
    %699 = vmatpush1.msra.mxu0 %v698
    %v700 = vand.u32 %v96, 4294901760
    %701 = vmatprep.subr.mxu0 %v700
    %v702 = vand.u32 %v95, 4294901760
    %703 = vmatpush1.msra.mxu0 %v702
    %704 = vmatprep.subr.mxu0 0.0
    %705 = vmatpush1.msra.mxu0 0.0
    %706 = vmatprep.subr.mxu0 0.0
    %707 = vmatpush1.msra.mxu0 0.0
    %708 = vmatprep.subr.mxu0 0.0
    %709 = vmatpush1.msra.mxu0 0.0
    %710 = vmatprep.subr.mxu0 0.0
    %711 = vmatpush1.msra.mxu0 0.0
    %712 = vmatprep.subr.mxu0 0.0
    %713 = vmatpush1.msra.mxu0 0.0
    %714 = vmatprep.subr.mxu0 0.0
    %715 = vmatpush1.msra.mxu0 0.0
    %716 = vmatprep.subr.mxu0 0.0
    %717 = vmatpush1.msra.mxu0 0.0
    %718 = vmatprep.subr.mxu0 0.0
    %719 = vmatpush1.msra.mxu0 0.0
    %720 = vmatprep.subr.mxu0 0.0
    %721 = vmatpush1.msra.mxu0 0.0
    %722 = vmatprep.subr.mxu0 0.0
    %723 = vmatpush1.msra.mxu0 0.0
    %724 = vmatprep.subr.mxu0 0.0
    %725 = vmatpush1.msra.mxu0 0.0
    %726 = vmatprep.subr.mxu0 0.0
    %727 = vmatpush1.msra.mxu0 0.0
    %728 = vmatprep.subr.mxu0 0.0
    %729 = vmatpush1.msra.mxu0 0.0
    %730 = vmatprep.subr.mxu0 0.0
    %731 = vmatpush1.msra.mxu0 0.0
    %732 = vmatprep.subr.mxu0 0.0
    %733 = vmatpush1.msra.mxu0 0.0
    %734 = vmatprep.subr.mxu0 0.0
    %735 = vmatpush1.msra.mxu0 0.0
    %736 = vmatprep.subr.mxu0 0.0
    %737 = vmatpush1.msra.mxu0 0.0
    %738 = vmatprep.subr.mxu0 0.0
    %739 = vmatpush1.msra.mxu0 0.0
    %740 = vmatprep.subr.mxu0 0.0
    %741 = vmatpush1.msra.mxu0 0.0
    %742 = vmatprep.subr.mxu0 0.0
    %743 = vmatpush1.msra.mxu0 0.0
    %744 = vmatprep.subr.mxu0 0.0
    %745 = vmatpush1.msra.mxu0 0.0
    %746 = vmatprep.subr.mxu0 0.0
    %747 = vmatpush1.msra.mxu0 0.0
    %748 = vmatprep.subr.mxu0 0.0
    %749 = vmatpush1.msra.mxu0 0.0
    %750 = vmatprep.subr.mxu0 0.0
    %751 = vmatpush1.msra.mxu0 0.0
    %752 = vmatprep.mubr.f32.mxu0 0.0
    %v753 = vand.u32 %v111, 4294901760
    %754 = vmatmul.mubr.f32.gmra.mrb[0].mxu0 %v753
    %v755 = vpop.f32.mrb[0].mxu0
    %v756 = vadd.f32 %v668, %v755
    %v757 = vpop.f32.mrb[0].mxu0
    %v758 = vadd.f32 %v670, %v757
    %759 = vdwg.mxu0
    %v760 = vtanh.pop %v756
    %v761 = vtanh.pop %v758
    %v762 = vld [vmem:[#allocation7] sm:$0xff]
    %v763 = vld [vmem:[#allocation7 + $0x8] sm:$0xff]
    %v764 = vld [vmem:[#allocation7 + $0x10] sm:$0xff]
    %v765 = vld [vmem:[#allocation7 + $0x18] sm:$0xff]
    %v766 = vld [vmem:[#allocation7 + $0x20] sm:$0xff]
    %v767 = vld [vmem:[#allocation7 + $0x28] sm:$0xff]
    %v768 = vld [vmem:[#allocation7 + $0x30] sm:$0xff]
    %v769 = vld [vmem:[#allocation7 + $0x38] sm:$0xff]
    %v770 = vld [vmem:[#allocation7 + $0x40] sm:$0xff]
    %v771 = vld [vmem:[#allocation7 + $0x48] sm:$0xff]
    %v772 = vld [vmem:[#allocation7 + $0x50] sm:$0xff]
    %v773 = vld [vmem:[#allocation7 + $0x58] sm:$0xff]
    %v774 = vld [vmem:[#allocation7 + $0x60] sm:$0xff]
    %v775 = vld [vmem:[#allocation7 + $0x68] sm:$0xff]
    %v776 = vld [vmem:[#allocation7 + $0x70] sm:$0xff]
    %v777 = vld [vmem:[#allocation7 + $0x78] sm:$0xff]
    %v778 = vld [vmem:[#allocation7 + $0x80] sm:$0xff]
    %v779 = vld [vmem:[#allocation7 + $0x88] sm:$0xff]
    %v780 = vld [vmem:[#allocation7 + $0x90] sm:$0xff]
    %v781 = vld [vmem:[#allocation7 + $0x98] sm:$0xff]
    %v782 = vld [vmem:[#allocation7 + $0xa0] sm:$0xff]
    %v783 = vld [vmem:[#allocation7 + $0xa8] sm:$0xff]
    %v784 = vld [vmem:[#allocation7 + $0xb0] sm:$0xff]
    %v785 = vld [vmem:[#allocation7 + $0xb8] sm:$0xff]
    %v786 = vld [vmem:[#allocation7 + $0xc0] sm:$0xff]
    %v787 = vld [vmem:[#allocation7 + $0xc8] sm:$0xff]
    %v788 = vld [vmem:[#allocation7 + $0xd0] sm:$0xff]
    %v789 = vld [vmem:[#allocation7 + $0xd8] sm:$0xff]
    %v790 = vld [vmem:[#allocation7 + $0xe0] sm:$0xff]
    %v791 = vld [vmem:[#allocation7 + $0xe8] sm:$0xff]
    %v792 = vld [vmem:[#allocation7 + $0xf0] sm:$0xff]
    %v793 = vld [vmem:[#allocation7 + $0xf8] sm:$0xff]
    %v794 = vld [vmem:[#allocation7 + $0x100] sm:$0xff]
    %v795 = vld [vmem:[#allocation7 + $0x108] sm:$0xff]
    %v796 = vld [vmem:[#allocation7 + $0x110] sm:$0xff]
    %v797 = vld [vmem:[#allocation7 + $0x118] sm:$0xff]
    %v798 = vld [vmem:[#allocation7 + $0x120] sm:$0xff]
    %v799 = vld [vmem:[#allocation7 + $0x128] sm:$0xff]
    %v800 = vld [vmem:[#allocation7 + $0x130] sm:$0xff]
    %v801 = vld [vmem:[#allocation7 + $0x138] sm:$0xff]
    %v802 = vld [vmem:[#allocation7 + $0x140] sm:$0xff]
    %v803 = vld [vmem:[#allocation7 + $0x148] sm:$0xff]
    %v804 = vld [vmem:[#allocation7 + $0x150] sm:$0xff]
    %v805 = vld [vmem:[#allocation7 + $0x158] sm:$0xff]
    %v806 = vld [vmem:[#allocation7 + $0x160] sm:$0xff]
    %v807 = vld [vmem:[#allocation7 + $0x168] sm:$0xff]
    %v808 = vld [vmem:[#allocation7 + $0x170] sm:$0xff]
    %v809 = vld [vmem:[#allocation7 + $0x178] sm:$0xff]
    %v810 = vld [vmem:[#allocation7 + $0x180] sm:$0xff]
    %v811 = vld [vmem:[#allocation7 + $0x188] sm:$0xff]
    %v812 = vld [vmem:[#allocation7 + $0x190] sm:$0xff]
    %v813 = vld [vmem:[#allocation7 + $0x198] sm:$0xff]
    %v814 = vld [vmem:[#allocation7 + $0x1a0] sm:$0xff]
    %v815 = vld [vmem:[#allocation7 + $0x1a8] sm:$0xff]
    %v816 = vld [vmem:[#allocation7 + $0x1b0] sm:$0xff]
    %v817 = vld [vmem:[#allocation7 + $0x1b8] sm:$0xff]
    %v818 = vld [vmem:[#allocation7 + $0x1c0] sm:$0xff]
    %v819 = vld [vmem:[#allocation7 + $0x1c8] sm:$0xff]
    %v820 = vld [vmem:[#allocation7 + $0x1d0] sm:$0xff]
    %v821 = vld [vmem:[#allocation7 + $0x1d8] sm:$0xff]
    %v822 = vld [vmem:[#allocation7 + $0x1e0] sm:$0xff]
    %v823 = vld [vmem:[#allocation7 + $0x1e8] sm:$0xff]
    %v824 = vld [vmem:[#allocation7 + $0x1f0] sm:$0xff]
    %v825 = vld [vmem:[#allocation7 + $0x1f8] sm:$0xff]
    %v826 = vld [vmem:[%s4] sm:$0x3]
    %v828 = vlaneseq
    %v829 = vshrl.u32 %v828, 7
    %v830 = vsub.s32 0, %v829
    %v831 = vrot.slane %v826, %v830
    %v832 = vlaneseq
    %v833 = vshrl.u32 %v832, 7
    %v834 = vsub.s32 1, %v833
    %v835 = vrot.slane %v826, %v834
    %v838 = vand.u32 %v763, 4294901760
    %839 = vmatprep.subr.mxu0 %v838
    %v840 = vand.u32 %v762, 4294901760
    %841 = vmatpush1.msra.mxu0 %v840
    %v842 = vand.u32 %v765, 4294901760
    %843 = vmatprep.subr.mxu0 %v842
    %v844 = vand.u32 %v764, 4294901760
    %845 = vmatpush1.msra.mxu0 %v844
    %v846 = vand.u32 %v767, 4294901760
    %847 = vmatprep.subr.mxu0 %v846
    %v848 = vand.u32 %v766, 4294901760
    %849 = vmatpush1.msra.mxu0 %v848
    %v850 = vand.u32 %v769, 4294901760
    %851 = vmatprep.subr.mxu0 %v850
    %v852 = vand.u32 %v768, 4294901760
    %853 = vmatpush1.msra.mxu0 %v852
    %v854 = vand.u32 %v771, 4294901760
    %855 = vmatprep.subr.mxu0 %v854
    %v856 = vand.u32 %v770, 4294901760
    %857 = vmatpush1.msra.mxu0 %v856
    %v858 = vand.u32 %v773, 4294901760
    %859 = vmatprep.subr.mxu0 %v858
    %v860 = vand.u32 %v772, 4294901760
    %861 = vmatpush1.msra.mxu0 %v860
    %v862 = vand.u32 %v775, 4294901760
    %863 = vmatprep.subr.mxu0 %v862
    %v864 = vand.u32 %v774, 4294901760
    %865 = vmatpush1.msra.mxu0 %v864
    %v866 = vand.u32 %v777, 4294901760
    %867 = vmatprep.subr.mxu0 %v866
    %v868 = vand.u32 %v776, 4294901760
    %869 = vmatpush1.msra.mxu0 %v868
    %v870 = vand.u32 %v779, 4294901760
    %871 = vmatprep.subr.mxu0 %v870
    %v872 = vand.u32 %v778, 4294901760
    %873 = vmatpush1.msra.mxu0 %v872
    %v874 = vand.u32 %v781, 4294901760
    %875 = vmatprep.subr.mxu0 %v874
    %v876 = vand.u32 %v780, 4294901760
    %877 = vmatpush1.msra.mxu0 %v876
    %v878 = vand.u32 %v783, 4294901760
    %879 = vmatprep.subr.mxu0 %v878
    %v880 = vand.u32 %v782, 4294901760
    %881 = vmatpush1.msra.mxu0 %v880
    %v882 = vand.u32 %v785, 4294901760
    %883 = vmatprep.subr.mxu0 %v882
    %v884 = vand.u32 %v784, 4294901760
    %885 = vmatpush1.msra.mxu0 %v884
    %v886 = vand.u32 %v787, 4294901760
    %887 = vmatprep.subr.mxu0 %v886
    %v888 = vand.u32 %v786, 4294901760
    %889 = vmatpush1.msra.mxu0 %v888
    %v890 = vand.u32 %v789, 4294901760
    %891 = vmatprep.subr.mxu0 %v890
    %v892 = vand.u32 %v788, 4294901760
    %893 = vmatpush1.msra.mxu0 %v892
    %v894 = vand.u32 %v791, 4294901760
    %895 = vmatprep.subr.mxu0 %v894
    %v896 = vand.u32 %v790, 4294901760
    %897 = vmatpush1.msra.mxu0 %v896
    %v898 = vand.u32 %v793, 4294901760
    %899 = vmatprep.subr.mxu0 %v898
    %v900 = vand.u32 %v792, 4294901760
    %901 = vmatpush1.msra.mxu0 %v900
    %v902 = vand.u32 %v795, 4294901760
    %903 = vmatprep.subr.mxu0 %v902
    %v904 = vand.u32 %v794, 4294901760
    %905 = vmatpush1.msra.mxu0 %v904
    %v906 = vand.u32 %v797, 4294901760
    %907 = vmatprep.subr.mxu0 %v906
    %v908 = vand.u32 %v796, 4294901760
    %909 = vmatpush1.msra.mxu0 %v908
    %v910 = vand.u32 %v799, 4294901760
    %911 = vmatprep.subr.mxu0 %v910
    %v912 = vand.u32 %v798, 4294901760
    %913 = vmatpush1.msra.mxu0 %v912
    %v914 = vand.u32 %v801, 4294901760
    %915 = vmatprep.subr.mxu0 %v914
    %v916 = vand.u32 %v800, 4294901760
    %917 = vmatpush1.msra.mxu0 %v916
    %v918 = vand.u32 %v803, 4294901760
    %919 = vmatprep.subr.mxu0 %v918
    %v920 = vand.u32 %v802, 4294901760
    %921 = vmatpush1.msra.mxu0 %v920
    %v922 = vand.u32 %v805, 4294901760
    %923 = vmatprep.subr.mxu0 %v922
    %v924 = vand.u32 %v804, 4294901760
    %925 = vmatpush1.msra.mxu0 %v924
    %v926 = vand.u32 %v807, 4294901760
    %927 = vmatprep.subr.mxu0 %v926
    %v928 = vand.u32 %v806, 4294901760
    %929 = vmatpush1.msra.mxu0 %v928
    %v930 = vand.u32 %v809, 4294901760
    %931 = vmatprep.subr.mxu0 %v930
    %v932 = vand.u32 %v808, 4294901760
    %933 = vmatpush1.msra.mxu0 %v932
    %v934 = vand.u32 %v811, 4294901760
    %935 = vmatprep.subr.mxu0 %v934
    %v936 = vand.u32 %v810, 4294901760
    %937 = vmatpush1.msra.mxu0 %v936
    %v938 = vand.u32 %v813, 4294901760
    %939 = vmatprep.subr.mxu0 %v938
    %v940 = vand.u32 %v812, 4294901760
    %941 = vmatpush1.msra.mxu0 %v940
    %v942 = vand.u32 %v815, 4294901760
    %943 = vmatprep.subr.mxu0 %v942
    %v944 = vand.u32 %v814, 4294901760
    %945 = vmatpush1.msra.mxu0 %v944
    %v946 = vand.u32 %v817, 4294901760
    %947 = vmatprep.subr.mxu0 %v946
    %v948 = vand.u32 %v816, 4294901760
    %949 = vmatpush1.msra.mxu0 %v948
    %v950 = vand.u32 %v819, 4294901760
    %951 = vmatprep.subr.mxu0 %v950
    %v952 = vand.u32 %v818, 4294901760
    %953 = vmatpush1.msra.mxu0 %v952
    %v954 = vand.u32 %v821, 4294901760
    %955 = vmatprep.subr.mxu0 %v954
    %v956 = vand.u32 %v820, 4294901760
    %957 = vmatpush1.msra.mxu0 %v956
    %v958 = vand.u32 %v823, 4294901760
    %959 = vmatprep.subr.mxu0 %v958
    %v960 = vand.u32 %v822, 4294901760
    %961 = vmatpush1.msra.mxu0 %v960
    %v962 = vand.u32 %v825, 4294901760
    %963 = vmatprep.subr.mxu0 %v962
    %v964 = vand.u32 %v824, 4294901760
    %965 = vmatpush1.msra.mxu0 %v964
    %v966 = vand.u32 %v761, 4294901760
    %v967 = vsub.f32 %v761, %v966
    %v968 = vand.u32 %v967, 4294901760
    %v969 = vsub.f32 %v967, %v968
    %v970 = vand.u32 %v969, 4294901760
    %971 = vmatprep.mubr.f32.mxu0 %v970
    %v972 = vand.u32 %v760, 4294901760
    %v973 = vsub.f32 %v760, %v972
    %v974 = vand.u32 %v973, 4294901760
    %v975 = vsub.f32 %v973, %v974
    %v976 = vand.u32 %v975, 4294901760
    %977 = vmatmul.mubr.f32.gmra.mrb[0].mxu0 %v976
    %v978 = vpop.f32.mrb[0].mxu0
    %v979 = vadd.f32 %v831, %v978
    %v980 = vpop.f32.mrb[0].mxu0
    %v981 = vadd.f32 %v835, %v980
    %982 = vdwg.mxu0
    %v983 = vand.u32 %v763, 4294901760
    %v984 = vsub.f32 %v763, %v983
    %v985 = vand.u32 %v984, 4294901760
    %v986 = vsub.f32 %v984, %v985
    %v987 = vand.u32 %v986, 4294901760
    %988 = vmatprep.subr.mxu0 %v987
    %v989 = vand.u32 %v762, 4294901760
    %v990 = vsub.f32 %v762, %v989
    %v991 = vand.u32 %v990, 4294901760
    %v992 = vsub.f32 %v990, %v991
    %v993 = vand.u32 %v992, 4294901760
    %994 = vmatpush1.msra.mxu0 %v993
    %v995 = vand.u32 %v765, 4294901760
    %v996 = vsub.f32 %v765, %v995
    %v997 = vand.u32 %v996, 4294901760
    %v998 = vsub.f32 %v996, %v997
    %v999 = vand.u32 %v998, 4294901760
    %1000 = vmatprep.subr.mxu0 %v999
    %v1001 = vand.u32 %v764, 4294901760
    %v1002 = vsub.f32 %v764, %v1001
    %v1003 = vand.u32 %v1002, 4294901760
    %v1004 = vsub.f32 %v1002, %v1003
    %v1005 = vand.u32 %v1004, 4294901760
    %1006 = vmatpush1.msra.mxu0 %v1005
    %v1007 = vand.u32 %v767, 4294901760
    %v1008 = vsub.f32 %v767, %v1007
    %v1009 = vand.u32 %v1008, 4294901760
    %v1010 = vsub.f32 %v1008, %v1009
    %v1011 = vand.u32 %v1010, 4294901760
    %1012 = vmatprep.subr.mxu0 %v1011
    %v1013 = vand.u32 %v766, 4294901760
    %v1014 = vsub.f32 %v766, %v1013
    %v1015 = vand.u32 %v1014, 4294901760
    %v1016 = vsub.f32 %v1014, %v1015
    %v1017 = vand.u32 %v1016, 4294901760
    %1018 = vmatpush1.msra.mxu0 %v1017
    %v1019 = vand.u32 %v769, 4294901760
    %v1020 = vsub.f32 %v769, %v1019
    %v1021 = vand.u32 %v1020, 4294901760
    %v1022 = vsub.f32 %v1020, %v1021
    %v1023 = vand.u32 %v1022, 4294901760
    %1024 = vmatprep.subr.mxu0 %v1023
    %v1025 = vand.u32 %v768, 4294901760
    %v1026 = vsub.f32 %v768, %v1025
    %v1027 = vand.u32 %v1026, 4294901760
    %v1028 = vsub.f32 %v1026, %v1027
    %v1029 = vand.u32 %v1028, 4294901760
    %1030 = vmatpush1.msra.mxu0 %v1029
    %v1031 = vand.u32 %v771, 4294901760
    %v1032 = vsub.f32 %v771, %v1031
    %v1033 = vand.u32 %v1032, 4294901760
    %v1034 = vsub.f32 %v1032, %v1033
    %v1035 = vand.u32 %v1034, 4294901760
    %1036 = vmatprep.subr.mxu0 %v1035
    %v1037 = vand.u32 %v770, 4294901760
    %v1038 = vsub.f32 %v770, %v1037
    %v1039 = vand.u32 %v1038, 4294901760
    %v1040 = vsub.f32 %v1038, %v1039
    %v1041 = vand.u32 %v1040, 4294901760
    %1042 = vmatpush1.msra.mxu0 %v1041
    %v1043 = vand.u32 %v773, 4294901760
    %v1044 = vsub.f32 %v773, %v1043
    %v1045 = vand.u32 %v1044, 4294901760
    %v1046 = vsub.f32 %v1044, %v1045
    %v1047 = vand.u32 %v1046, 4294901760
    %1048 = vmatprep.subr.mxu0 %v1047
    %v1049 = vand.u32 %v772, 4294901760
    %v1050 = vsub.f32 %v772, %v1049
    %v1051 = vand.u32 %v1050, 4294901760
    %v1052 = vsub.f32 %v1050, %v1051
    %v1053 = vand.u32 %v1052, 4294901760
    %1054 = vmatpush1.msra.mxu0 %v1053
    %v1055 = vand.u32 %v775, 4294901760
    %v1056 = vsub.f32 %v775, %v1055
    %v1057 = vand.u32 %v1056, 4294901760
    %v1058 = vsub.f32 %v1056, %v1057
    %v1059 = vand.u32 %v1058, 4294901760
    %1060 = vmatprep.subr.mxu0 %v1059
    %v1061 = vand.u32 %v774, 4294901760
    %v1062 = vsub.f32 %v774, %v1061
    %v1063 = vand.u32 %v1062, 4294901760
    %v1064 = vsub.f32 %v1062, %v1063
    %v1065 = vand.u32 %v1064, 4294901760
    %1066 = vmatpush1.msra.mxu0 %v1065
    %v1067 = vand.u32 %v777, 4294901760
    %v1068 = vsub.f32 %v777, %v1067
    %v1069 = vand.u32 %v1068, 4294901760
    %v1070 = vsub.f32 %v1068, %v1069
    %v1071 = vand.u32 %v1070, 4294901760
    %1072 = vmatprep.subr.mxu0 %v1071
    %v1073 = vand.u32 %v776, 4294901760
    %v1074 = vsub.f32 %v776, %v1073
    %v1075 = vand.u32 %v1074, 4294901760
    %v1076 = vsub.f32 %v1074, %v1075
    %v1077 = vand.u32 %v1076, 4294901760
    %1078 = vmatpush1.msra.mxu0 %v1077
    %v1079 = vand.u32 %v779, 4294901760
    %v1080 = vsub.f32 %v779, %v1079
    %v1081 = vand.u32 %v1080, 4294901760
    %v1082 = vsub.f32 %v1080, %v1081
    %v1083 = vand.u32 %v1082, 4294901760
    %1084 = vmatprep.subr.mxu0 %v1083
    %v1085 = vand.u32 %v778, 4294901760
    %v1086 = vsub.f32 %v778, %v1085
    %v1087 = vand.u32 %v1086, 4294901760
    %v1088 = vsub.f32 %v1086, %v1087
    %v1089 = vand.u32 %v1088, 4294901760
    %1090 = vmatpush1.msra.mxu0 %v1089
    %v1091 = vand.u32 %v781, 4294901760
    %v1092 = vsub.f32 %v781, %v1091
    %v1093 = vand.u32 %v1092, 4294901760
    %v1094 = vsub.f32 %v1092, %v1093
    %v1095 = vand.u32 %v1094, 4294901760
    %1096 = vmatprep.subr.mxu0 %v1095
    %v1097 = vand.u32 %v780, 4294901760
    %v1098 = vsub.f32 %v780, %v1097
    %v1099 = vand.u32 %v1098, 4294901760
    %v1100 = vsub.f32 %v1098, %v1099
    %v1101 = vand.u32 %v1100, 4294901760
    %1102 = vmatpush1.msra.mxu0 %v1101
    %v1103 = vand.u32 %v783, 4294901760
    %v1104 = vsub.f32 %v783, %v1103
    %v1105 = vand.u32 %v1104, 4294901760
    %v1106 = vsub.f32 %v1104, %v1105
    %v1107 = vand.u32 %v1106, 4294901760
    %1108 = vmatprep.subr.mxu0 %v1107
    %v1109 = vand.u32 %v782, 4294901760
    %v1110 = vsub.f32 %v782, %v1109
    %v1111 = vand.u32 %v1110, 4294901760
    %v1112 = vsub.f32 %v1110, %v1111
    %v1113 = vand.u32 %v1112, 4294901760
    %1114 = vmatpush1.msra.mxu0 %v1113
    %v1115 = vand.u32 %v785, 4294901760
    %v1116 = vsub.f32 %v785, %v1115
    %v1117 = vand.u32 %v1116, 4294901760
    %v1118 = vsub.f32 %v1116, %v1117
    %v1119 = vand.u32 %v1118, 4294901760
    %1120 = vmatprep.subr.mxu0 %v1119
    %v1121 = vand.u32 %v784, 4294901760
    %v1122 = vsub.f32 %v784, %v1121
    %v1123 = vand.u32 %v1122, 4294901760
    %v1124 = vsub.f32 %v1122, %v1123
    %v1125 = vand.u32 %v1124, 4294901760
    %1126 = vmatpush1.msra.mxu0 %v1125
    %v1127 = vand.u32 %v787, 4294901760
    %v1128 = vsub.f32 %v787, %v1127
    %v1129 = vand.u32 %v1128, 4294901760
    %v1130 = vsub.f32 %v1128, %v1129
    %v1131 = vand.u32 %v1130, 4294901760
    %1132 = vmatprep.subr.mxu0 %v1131
    %v1133 = vand.u32 %v786, 4294901760
    %v1134 = vsub.f32 %v786, %v1133
    %v1135 = vand.u32 %v1134, 4294901760
    %v1136 = vsub.f32 %v1134, %v1135
    %v1137 = vand.u32 %v1136, 4294901760
    %1138 = vmatpush1.msra.mxu0 %v1137
    %v1139 = vand.u32 %v789, 4294901760
    %v1140 = vsub.f32 %v789, %v1139
    %v1141 = vand.u32 %v1140, 4294901760
    %v1142 = vsub.f32 %v1140, %v1141
    %v1143 = vand.u32 %v1142, 4294901760
    %1144 = vmatprep.subr.mxu0 %v1143
    %v1145 = vand.u32 %v788, 4294901760
    %v1146 = vsub.f32 %v788, %v1145
    %v1147 = vand.u32 %v1146, 4294901760
    %v1148 = vsub.f32 %v1146, %v1147
    %v1149 = vand.u32 %v1148, 4294901760
    %1150 = vmatpush1.msra.mxu0 %v1149
    %v1151 = vand.u32 %v791, 4294901760
    %v1152 = vsub.f32 %v791, %v1151
    %v1153 = vand.u32 %v1152, 4294901760
    %v1154 = vsub.f32 %v1152, %v1153
    %v1155 = vand.u32 %v1154, 4294901760
    %1156 = vmatprep.subr.mxu0 %v1155
    %v1157 = vand.u32 %v790, 4294901760
    %v1158 = vsub.f32 %v790, %v1157
    %v1159 = vand.u32 %v1158, 4294901760
    %v1160 = vsub.f32 %v1158, %v1159
    %v1161 = vand.u32 %v1160, 4294901760
    %1162 = vmatpush1.msra.mxu0 %v1161
    %v1163 = vand.u32 %v793, 4294901760
    %v1164 = vsub.f32 %v793, %v1163
    %v1165 = vand.u32 %v1164, 4294901760
    %v1166 = vsub.f32 %v1164, %v1165
    %v1167 = vand.u32 %v1166, 4294901760
    %1168 = vmatprep.subr.mxu0 %v1167
    %v1169 = vand.u32 %v792, 4294901760
    %v1170 = vsub.f32 %v792, %v1169
    %v1171 = vand.u32 %v1170, 4294901760
    %v1172 = vsub.f32 %v1170, %v1171
    %v1173 = vand.u32 %v1172, 4294901760
    %1174 = vmatpush1.msra.mxu0 %v1173
    %v1175 = vand.u32 %v795, 4294901760
    %v1176 = vsub.f32 %v795, %v1175
    %v1177 = vand.u32 %v1176, 4294901760
    %v1178 = vsub.f32 %v1176, %v1177
    %v1179 = vand.u32 %v1178, 4294901760
    %1180 = vmatprep.subr.mxu0 %v1179
    %v1181 = vand.u32 %v794, 4294901760
    %v1182 = vsub.f32 %v794, %v1181
    %v1183 = vand.u32 %v1182, 4294901760
    %v1184 = vsub.f32 %v1182, %v1183
    %v1185 = vand.u32 %v1184, 4294901760
    %1186 = vmatpush1.msra.mxu0 %v1185
    %v1187 = vand.u32 %v797, 4294901760
    %v1188 = vsub.f32 %v797, %v1187
    %v1189 = vand.u32 %v1188, 4294901760
    %v1190 = vsub.f32 %v1188, %v1189
    %v1191 = vand.u32 %v1190, 4294901760
    %1192 = vmatprep.subr.mxu0 %v1191
    %v1193 = vand.u32 %v796, 4294901760
    %v1194 = vsub.f32 %v796, %v1193
    %v1195 = vand.u32 %v1194, 4294901760
    %v1196 = vsub.f32 %v1194, %v1195
    %v1197 = vand.u32 %v1196, 4294901760
    %1198 = vmatpush1.msra.mxu0 %v1197
    %v1199 = vand.u32 %v799, 4294901760
    %v1200 = vsub.f32 %v799, %v1199
    %v1201 = vand.u32 %v1200, 4294901760
    %v1202 = vsub.f32 %v1200, %v1201
    %v1203 = vand.u32 %v1202, 4294901760
    %1204 = vmatprep.subr.mxu0 %v1203
    %v1205 = vand.u32 %v798, 4294901760
    %v1206 = vsub.f32 %v798, %v1205
    %v1207 = vand.u32 %v1206, 4294901760
    %v1208 = vsub.f32 %v1206, %v1207
    %v1209 = vand.u32 %v1208, 4294901760
    %1210 = vmatpush1.msra.mxu0 %v1209
    %v1211 = vand.u32 %v801, 4294901760
    %v1212 = vsub.f32 %v801, %v1211
    %v1213 = vand.u32 %v1212, 4294901760
    %v1214 = vsub.f32 %v1212, %v1213
    %v1215 = vand.u32 %v1214, 4294901760
    %1216 = vmatprep.subr.mxu0 %v1215
    %v1217 = vand.u32 %v800, 4294901760
    %v1218 = vsub.f32 %v800, %v1217
    %v1219 = vand.u32 %v1218, 4294901760
    %v1220 = vsub.f32 %v1218, %v1219
    %v1221 = vand.u32 %v1220, 4294901760
    %1222 = vmatpush1.msra.mxu0 %v1221
    %v1223 = vand.u32 %v803, 4294901760
    %v1224 = vsub.f32 %v803, %v1223
    %v1225 = vand.u32 %v1224, 4294901760
    %v1226 = vsub.f32 %v1224, %v1225
    %v1227 = vand.u32 %v1226, 4294901760
    %1228 = vmatprep.subr.mxu0 %v1227
    %v1229 = vand.u32 %v802, 4294901760
    %v1230 = vsub.f32 %v802, %v1229
    %v1231 = vand.u32 %v1230, 4294901760
    %v1232 = vsub.f32 %v1230, %v1231
    %v1233 = vand.u32 %v1232, 4294901760
    %1234 = vmatpush1.msra.mxu0 %v1233
    %v1235 = vand.u32 %v805, 4294901760
    %v1236 = vsub.f32 %v805, %v1235
    %v1237 = vand.u32 %v1236, 4294901760
    %v1238 = vsub.f32 %v1236, %v1237
    %v1239 = vand.u32 %v1238, 4294901760
    %1240 = vmatprep.subr.mxu0 %v1239
    %v1241 = vand.u32 %v804, 4294901760
    %v1242 = vsub.f32 %v804, %v1241
    %v1243 = vand.u32 %v1242, 4294901760
    %v1244 = vsub.f32 %v1242, %v1243
    %v1245 = vand.u32 %v1244, 4294901760
    %1246 = vmatpush1.msra.mxu0 %v1245
    %v1247 = vand.u32 %v807, 4294901760
    %v1248 = vsub.f32 %v807, %v1247
    %v1249 = vand.u32 %v1248, 4294901760
    %v1250 = vsub.f32 %v1248, %v1249
    %v1251 = vand.u32 %v1250, 4294901760
    %1252 = vmatprep.subr.mxu0 %v1251
    %v1253 = vand.u32 %v806, 4294901760
    %v1254 = vsub.f32 %v806, %v1253
    %v1255 = vand.u32 %v1254, 4294901760
    %v1256 = vsub.f32 %v1254, %v1255
    %v1257 = vand.u32 %v1256, 4294901760
    %1258 = vmatpush1.msra.mxu0 %v1257
    %v1259 = vand.u32 %v809, 4294901760
    %v1260 = vsub.f32 %v809, %v1259
    %v1261 = vand.u32 %v1260, 4294901760
    %v1262 = vsub.f32 %v1260, %v1261
    %v1263 = vand.u32 %v1262, 4294901760
    %1264 = vmatprep.subr.mxu0 %v1263
    %v1265 = vand.u32 %v808, 4294901760
    %v1266 = vsub.f32 %v808, %v1265
    %v1267 = vand.u32 %v1266, 4294901760
    %v1268 = vsub.f32 %v1266, %v1267
    %v1269 = vand.u32 %v1268, 4294901760
    %1270 = vmatpush1.msra.mxu0 %v1269
    %v1271 = vand.u32 %v811, 4294901760
    %v1272 = vsub.f32 %v811, %v1271
    %v1273 = vand.u32 %v1272, 4294901760
    %v1274 = vsub.f32 %v1272, %v1273
    %v1275 = vand.u32 %v1274, 4294901760
    %1276 = vmatprep.subr.mxu0 %v1275
    %v1277 = vand.u32 %v810, 4294901760
    %v1278 = vsub.f32 %v810, %v1277
    %v1279 = vand.u32 %v1278, 4294901760
    %v1280 = vsub.f32 %v1278, %v1279
    %v1281 = vand.u32 %v1280, 4294901760
    %1282 = vmatpush1.msra.mxu0 %v1281
    %v1283 = vand.u32 %v813, 4294901760
    %v1284 = vsub.f32 %v813, %v1283
    %v1285 = vand.u32 %v1284, 4294901760
    %v1286 = vsub.f32 %v1284, %v1285
    %v1287 = vand.u32 %v1286, 4294901760
    %1288 = vmatprep.subr.mxu0 %v1287
    %v1289 = vand.u32 %v812, 4294901760
    %v1290 = vsub.f32 %v812, %v1289
    %v1291 = vand.u32 %v1290, 4294901760
    %v1292 = vsub.f32 %v1290, %v1291
    %v1293 = vand.u32 %v1292, 4294901760
    %1294 = vmatpush1.msra.mxu0 %v1293
    %v1295 = vand.u32 %v815, 4294901760
    %v1296 = vsub.f32 %v815, %v1295
    %v1297 = vand.u32 %v1296, 4294901760
    %v1298 = vsub.f32 %v1296, %v1297
    %v1299 = vand.u32 %v1298, 4294901760
    %1300 = vmatprep.subr.mxu0 %v1299
    %v1301 = vand.u32 %v814, 4294901760
    %v1302 = vsub.f32 %v814, %v1301
    %v1303 = vand.u32 %v1302, 4294901760
    %v1304 = vsub.f32 %v1302, %v1303
    %v1305 = vand.u32 %v1304, 4294901760
    %1306 = vmatpush1.msra.mxu0 %v1305
    %v1307 = vand.u32 %v817, 4294901760
    %v1308 = vsub.f32 %v817, %v1307
    %v1309 = vand.u32 %v1308, 4294901760
    %v1310 = vsub.f32 %v1308, %v1309
    %v1311 = vand.u32 %v1310, 4294901760
    %1312 = vmatprep.subr.mxu0 %v1311
    %v1313 = vand.u32 %v816, 4294901760
    %v1314 = vsub.f32 %v816, %v1313
    %v1315 = vand.u32 %v1314, 4294901760
    %v1316 = vsub.f32 %v1314, %v1315
    %v1317 = vand.u32 %v1316, 4294901760
    %1318 = vmatpush1.msra.mxu0 %v1317
    %v1319 = vand.u32 %v819, 4294901760
    %v1320 = vsub.f32 %v819, %v1319
    %v1321 = vand.u32 %v1320, 4294901760
    %v1322 = vsub.f32 %v1320, %v1321
    %v1323 = vand.u32 %v1322, 4294901760
    %1324 = vmatprep.subr.mxu0 %v1323
    %v1325 = vand.u32 %v818, 4294901760
    %v1326 = vsub.f32 %v818, %v1325
    %v1327 = vand.u32 %v1326, 4294901760
    %v1328 = vsub.f32 %v1326, %v1327
    %v1329 = vand.u32 %v1328, 4294901760
    %1330 = vmatpush1.msra.mxu0 %v1329
    %v1331 = vand.u32 %v821, 4294901760
    %v1332 = vsub.f32 %v821, %v1331
    %v1333 = vand.u32 %v1332, 4294901760
    %v1334 = vsub.f32 %v1332, %v1333
    %v1335 = vand.u32 %v1334, 4294901760
    %1336 = vmatprep.subr.mxu0 %v1335
    %v1337 = vand.u32 %v820, 4294901760
    %v1338 = vsub.f32 %v820, %v1337
    %v1339 = vand.u32 %v1338, 4294901760
    %v1340 = vsub.f32 %v1338, %v1339
    %v1341 = vand.u32 %v1340, 4294901760
    %1342 = vmatpush1.msra.mxu0 %v1341
    %v1343 = vand.u32 %v823, 4294901760
    %v1344 = vsub.f32 %v823, %v1343
    %v1345 = vand.u32 %v1344, 4294901760
    %v1346 = vsub.f32 %v1344, %v1345
    %v1347 = vand.u32 %v1346, 4294901760
    %1348 = vmatprep.subr.mxu0 %v1347
    %v1349 = vand.u32 %v822, 4294901760
    %v1350 = vsub.f32 %v822, %v1349
    %v1351 = vand.u32 %v1350, 4294901760
    %v1352 = vsub.f32 %v1350, %v1351
    %v1353 = vand.u32 %v1352, 4294901760
    %1354 = vmatpush1.msra.mxu0 %v1353
    %v1355 = vand.u32 %v825, 4294901760
    %v1356 = vsub.f32 %v825, %v1355
    %v1357 = vand.u32 %v1356, 4294901760
    %v1358 = vsub.f32 %v1356, %v1357
    %v1359 = vand.u32 %v1358, 4294901760
    %1360 = vmatprep.subr.mxu0 %v1359
    %v1361 = vand.u32 %v824, 4294901760
    %v1362 = vsub.f32 %v824, %v1361
    %v1363 = vand.u32 %v1362, 4294901760
    %v1364 = vsub.f32 %v1362, %v1363
    %v1365 = vand.u32 %v1364, 4294901760
    %1366 = vmatpush1.msra.mxu0 %v1365
    %v1367 = vand.u32 %v761, 4294901760
    %1368 = vmatprep.mubr.f32.mxu0 %v1367
    %v1369 = vand.u32 %v760, 4294901760
    %1370 = vmatmul.mubr.f32.gmra.mrb[0].mxu0 %v1369
    %v1371 = vpop.f32.mrb[0].mxu0
    %v1372 = vadd.f32 %v979, %v1371
    %v1373 = vpop.f32.mrb[0].mxu0
    %v1374 = vadd.f32 %v981, %v1373
    %1375 = vdwg.mxu0
    %v1376 = vand.u32 %v763, 4294901760
    %v1377 = vsub.f32 %v763, %v1376
    %1378 = vmatprep.subr.mxu0 %v1377
    %v1379 = vand.u32 %v762, 4294901760
    %v1380 = vsub.f32 %v762, %v1379
    %1381 = vmatpush1.msra.mxu0 %v1380
    %v1382 = vand.u32 %v765, 4294901760
    %v1383 = vsub.f32 %v765, %v1382
    %1384 = vmatprep.subr.mxu0 %v1383
    %v1385 = vand.u32 %v764, 4294901760
    %v1386 = vsub.f32 %v764, %v1385
    %1387 = vmatpush1.msra.mxu0 %v1386
    %v1388 = vand.u32 %v767, 4294901760
    %v1389 = vsub.f32 %v767, %v1388
    %1390 = vmatprep.subr.mxu0 %v1389
    %v1391 = vand.u32 %v766, 4294901760
    %v1392 = vsub.f32 %v766, %v1391
    %1393 = vmatpush1.msra.mxu0 %v1392
    %v1394 = vand.u32 %v769, 4294901760
    %v1395 = vsub.f32 %v769, %v1394
    %1396 = vmatprep.subr.mxu0 %v1395
    %v1397 = vand.u32 %v768, 4294901760
    %v1398 = vsub.f32 %v768, %v1397
    %1399 = vmatpush1.msra.mxu0 %v1398
    %v1400 = vand.u32 %v771, 4294901760
    %v1401 = vsub.f32 %v771, %v1400
    %1402 = vmatprep.subr.mxu0 %v1401
    %v1403 = vand.u32 %v770, 4294901760
    %v1404 = vsub.f32 %v770, %v1403
    %1405 = vmatpush1.msra.mxu0 %v1404
    %v1406 = vand.u32 %v773, 4294901760
    %v1407 = vsub.f32 %v773, %v1406
    %1408 = vmatprep.subr.mxu0 %v1407
    %v1409 = vand.u32 %v772, 4294901760
    %v1410 = vsub.f32 %v772, %v1409
    %1411 = vmatpush1.msra.mxu0 %v1410
    %v1412 = vand.u32 %v775, 4294901760
    %v1413 = vsub.f32 %v775, %v1412
    %1414 = vmatprep.subr.mxu0 %v1413
    %v1415 = vand.u32 %v774, 4294901760
    %v1416 = vsub.f32 %v774, %v1415
    %1417 = vmatpush1.msra.mxu0 %v1416
    %v1418 = vand.u32 %v777, 4294901760
    %v1419 = vsub.f32 %v777, %v1418
    %1420 = vmatprep.subr.mxu0 %v1419
    %v1421 = vand.u32 %v776, 4294901760
    %v1422 = vsub.f32 %v776, %v1421
    %1423 = vmatpush1.msra.mxu0 %v1422
    %v1424 = vand.u32 %v779, 4294901760
    %v1425 = vsub.f32 %v779, %v1424
    %1426 = vmatprep.subr.mxu0 %v1425
    %v1427 = vand.u32 %v778, 4294901760
    %v1428 = vsub.f32 %v778, %v1427
    %1429 = vmatpush1.msra.mxu0 %v1428
    %v1430 = vand.u32 %v781, 4294901760
    %v1431 = vsub.f32 %v781, %v1430
    %1432 = vmatprep.subr.mxu0 %v1431
    %v1433 = vand.u32 %v780, 4294901760
    %v1434 = vsub.f32 %v780, %v1433
    %1435 = vmatpush1.msra.mxu0 %v1434
    %v1436 = vand.u32 %v783, 4294901760
    %v1437 = vsub.f32 %v783, %v1436
    %1438 = vmatprep.subr.mxu0 %v1437
    %v1439 = vand.u32 %v782, 4294901760
    %v1440 = vsub.f32 %v782, %v1439
    %1441 = vmatpush1.msra.mxu0 %v1440
    %v1442 = vand.u32 %v785, 4294901760
    %v1443 = vsub.f32 %v785, %v1442
    %1444 = vmatprep.subr.mxu0 %v1443
    %v1445 = vand.u32 %v784, 4294901760
    %v1446 = vsub.f32 %v784, %v1445
    %1447 = vmatpush1.msra.mxu0 %v1446
    %v1448 = vand.u32 %v787, 4294901760
    %v1449 = vsub.f32 %v787, %v1448
    %1450 = vmatprep.subr.mxu0 %v1449
    %v1451 = vand.u32 %v786, 4294901760
    %v1452 = vsub.f32 %v786, %v1451
    %1453 = vmatpush1.msra.mxu0 %v1452
    %v1454 = vand.u32 %v789, 4294901760
    %v1455 = vsub.f32 %v789, %v1454
    %1456 = vmatprep.subr.mxu0 %v1455
    %v1457 = vand.u32 %v788, 4294901760
    %v1458 = vsub.f32 %v788, %v1457
    %1459 = vmatpush1.msra.mxu0 %v1458
    %v1460 = vand.u32 %v791, 4294901760
    %v1461 = vsub.f32 %v791, %v1460
    %1462 = vmatprep.subr.mxu0 %v1461
    %v1463 = vand.u32 %v790, 4294901760
    %v1464 = vsub.f32 %v790, %v1463
    %1465 = vmatpush1.msra.mxu0 %v1464
    %v1466 = vand.u32 %v793, 4294901760
    %v1467 = vsub.f32 %v793, %v1466
    %1468 = vmatprep.subr.mxu0 %v1467
    %v1469 = vand.u32 %v792, 4294901760
    %v1470 = vsub.f32 %v792, %v1469
    %1471 = vmatpush1.msra.mxu0 %v1470
    %v1472 = vand.u32 %v795, 4294901760
    %v1473 = vsub.f32 %v795, %v1472
    %1474 = vmatprep.subr.mxu0 %v1473
    %v1475 = vand.u32 %v794, 4294901760
    %v1476 = vsub.f32 %v794, %v1475
    %1477 = vmatpush1.msra.mxu0 %v1476
    %v1478 = vand.u32 %v797, 4294901760
    %v1479 = vsub.f32 %v797, %v1478
    %1480 = vmatprep.subr.mxu0 %v1479
    %v1481 = vand.u32 %v796, 4294901760
    %v1482 = vsub.f32 %v796, %v1481
    %1483 = vmatpush1.msra.mxu0 %v1482
    %v1484 = vand.u32 %v799, 4294901760
    %v1485 = vsub.f32 %v799, %v1484
    %1486 = vmatprep.subr.mxu0 %v1485
    %v1487 = vand.u32 %v798, 4294901760
    %v1488 = vsub.f32 %v798, %v1487
    %1489 = vmatpush1.msra.mxu0 %v1488
    %v1490 = vand.u32 %v801, 4294901760
    %v1491 = vsub.f32 %v801, %v1490
    %1492 = vmatprep.subr.mxu0 %v1491
    %v1493 = vand.u32 %v800, 4294901760
    %v1494 = vsub.f32 %v800, %v1493
    %1495 = vmatpush1.msra.mxu0 %v1494
    %v1496 = vand.u32 %v803, 4294901760
    %v1497 = vsub.f32 %v803, %v1496
    %1498 = vmatprep.subr.mxu0 %v1497
    %v1499 = vand.u32 %v802, 4294901760
    %v1500 = vsub.f32 %v802, %v1499
    %1501 = vmatpush1.msra.mxu0 %v1500
    %v1502 = vand.u32 %v805, 4294901760
    %v1503 = vsub.f32 %v805, %v1502
    %1504 = vmatprep.subr.mxu0 %v1503
    %v1505 = vand.u32 %v804, 4294901760
    %v1506 = vsub.f32 %v804, %v1505
    %1507 = vmatpush1.msra.mxu0 %v1506
    %v1508 = vand.u32 %v807, 4294901760
    %v1509 = vsub.f32 %v807, %v1508
    %1510 = vmatprep.subr.mxu0 %v1509
    %v1511 = vand.u32 %v806, 4294901760
    %v1512 = vsub.f32 %v806, %v1511
    %1513 = vmatpush1.msra.mxu0 %v1512
    %v1514 = vand.u32 %v809, 4294901760
    %v1515 = vsub.f32 %v809, %v1514
    %1516 = vmatprep.subr.mxu0 %v1515
    %v1517 = vand.u32 %v808, 4294901760
    %v1518 = vsub.f32 %v808, %v1517
    %1519 = vmatpush1.msra.mxu0 %v1518
    %v1520 = vand.u32 %v811, 4294901760
    %v1521 = vsub.f32 %v811, %v1520
    %1522 = vmatprep.subr.mxu0 %v1521
    %v1523 = vand.u32 %v810, 4294901760
    %v1524 = vsub.f32 %v810, %v1523
    %1525 = vmatpush1.msra.mxu0 %v1524
    %v1526 = vand.u32 %v813, 4294901760
    %v1527 = vsub.f32 %v813, %v1526
    %1528 = vmatprep.subr.mxu0 %v1527
    %v1529 = vand.u32 %v812, 4294901760
    %v1530 = vsub.f32 %v812, %v1529
    %1531 = vmatpush1.msra.mxu0 %v1530
    %v1532 = vand.u32 %v815, 4294901760
    %v1533 = vsub.f32 %v815, %v1532
    %1534 = vmatprep.subr.mxu0 %v1533
    %v1535 = vand.u32 %v814, 4294901760
    %v1536 = vsub.f32 %v814, %v1535
    %1537 = vmatpush1.msra.mxu0 %v1536
    %v1538 = vand.u32 %v817, 4294901760
    %v1539 = vsub.f32 %v817, %v1538
    %1540 = vmatprep.subr.mxu0 %v1539
    %v1541 = vand.u32 %v816, 4294901760
    %v1542 = vsub.f32 %v816, %v1541
    %1543 = vmatpush1.msra.mxu0 %v1542
    %v1544 = vand.u32 %v819, 4294901760
    %v1545 = vsub.f32 %v819, %v1544
    %1546 = vmatprep.subr.mxu0 %v1545
    %v1547 = vand.u32 %v818, 4294901760
    %v1548 = vsub.f32 %v818, %v1547
    %1549 = vmatpush1.msra.mxu0 %v1548
    %v1550 = vand.u32 %v821, 4294901760
    %v1551 = vsub.f32 %v821, %v1550
    %1552 = vmatprep.subr.mxu0 %v1551
    %v1553 = vand.u32 %v820, 4294901760
    %v1554 = vsub.f32 %v820, %v1553
    %1555 = vmatpush1.msra.mxu0 %v1554
    %v1556 = vand.u32 %v823, 4294901760
    %v1557 = vsub.f32 %v823, %v1556
    %1558 = vmatprep.subr.mxu0 %v1557
    %v1559 = vand.u32 %v822, 4294901760
    %v1560 = vsub.f32 %v822, %v1559
    %1561 = vmatpush1.msra.mxu0 %v1560
    %v1562 = vand.u32 %v825, 4294901760
    %v1563 = vsub.f32 %v825, %v1562
    %1564 = vmatprep.subr.mxu0 %v1563
    %v1565 = vand.u32 %v824, 4294901760
    %v1566 = vsub.f32 %v824, %v1565
    %1567 = vmatpush1.msra.mxu0 %v1566
    %v1568 = vand.u32 %v761, 4294901760
    %v1569 = vsub.f32 %v761, %v1568
    %1570 = vmatprep.mubr.f32.mxu0 %v1569
    %v1571 = vand.u32 %v760, 4294901760
    %v1572 = vsub.f32 %v760, %v1571
    %1573 = vmatmul.mubr.f32.gmra.mrb[0].mxu0 %v1572
    %v1574 = vpop.f32.mrb[0].mxu0
    %v1575 = vadd.f32 %v1372, %v1574
    %v1576 = vpop.f32.mrb[0].mxu0
    %v1577 = vadd.f32 %v1374, %v1576
    %1578 = vdwg.mxu0
    %v1579 = vand.u32 %v763, 4294901760
    %1580 = vmatprep.subr.mxu0 %v1579
    %v1581 = vand.u32 %v762, 4294901760
    %1582 = vmatpush1.msra.mxu0 %v1581
    %v1583 = vand.u32 %v765, 4294901760
    %1584 = vmatprep.subr.mxu0 %v1583
    %v1585 = vand.u32 %v764, 4294901760
    %1586 = vmatpush1.msra.mxu0 %v1585
    %v1587 = vand.u32 %v767, 4294901760
    %1588 = vmatprep.subr.mxu0 %v1587
    %v1589 = vand.u32 %v766, 4294901760
    %1590 = vmatpush1.msra.mxu0 %v1589
    %v1591 = vand.u32 %v769, 4294901760
    %1592 = vmatprep.subr.mxu0 %v1591
    %v1593 = vand.u32 %v768, 4294901760
    %1594 = vmatpush1.msra.mxu0 %v1593
    %v1595 = vand.u32 %v771, 4294901760
    %1596 = vmatprep.subr.mxu0 %v1595
    %v1597 = vand.u32 %v770, 4294901760
    %1598 = vmatpush1.msra.mxu0 %v1597
    %v1599 = vand.u32 %v773, 4294901760
    %1600 = vmatprep.subr.mxu0 %v1599
    %v1601 = vand.u32 %v772, 4294901760
    %1602 = vmatpush1.msra.mxu0 %v1601
    %v1603 = vand.u32 %v775, 4294901760
    %1604 = vmatprep.subr.mxu0 %v1603
    %v1605 = vand.u32 %v774, 4294901760
    %1606 = vmatpush1.msra.mxu0 %v1605
    %v1607 = vand.u32 %v777, 4294901760
    %1608 = vmatprep.subr.mxu0 %v1607
    %v1609 = vand.u32 %v776, 4294901760
    %1610 = vmatpush1.msra.mxu0 %v1609
    %v1611 = vand.u32 %v779, 4294901760
    %1612 = vmatprep.subr.mxu0 %v1611
    %v1613 = vand.u32 %v778, 4294901760
    %1614 = vmatpush1.msra.mxu0 %v1613
    %v1615 = vand.u32 %v781, 4294901760
    %1616 = vmatprep.subr.mxu0 %v1615
    %v1617 = vand.u32 %v780, 4294901760
    %1618 = vmatpush1.msra.mxu0 %v1617
    %v1619 = vand.u32 %v783, 4294901760
    %1620 = vmatprep.subr.mxu0 %v1619
    %v1621 = vand.u32 %v782, 4294901760
    %1622 = vmatpush1.msra.mxu0 %v1621
    %v1623 = vand.u32 %v785, 4294901760
    %1624 = vmatprep.subr.mxu0 %v1623
    %v1625 = vand.u32 %v784, 4294901760
    %1626 = vmatpush1.msra.mxu0 %v1625
    %v1627 = vand.u32 %v787, 4294901760
    %1628 = vmatprep.subr.mxu0 %v1627
    %v1629 = vand.u32 %v786, 4294901760
    %1630 = vmatpush1.msra.mxu0 %v1629
    %v1631 = vand.u32 %v789, 4294901760
    %1632 = vmatprep.subr.mxu0 %v1631
    %v1633 = vand.u32 %v788, 4294901760
    %1634 = vmatpush1.msra.mxu0 %v1633
    %v1635 = vand.u32 %v791, 4294901760
    %1636 = vmatprep.subr.mxu0 %v1635
    %v1637 = vand.u32 %v790, 4294901760
    %1638 = vmatpush1.msra.mxu0 %v1637
    %v1639 = vand.u32 %v793, 4294901760
    %1640 = vmatprep.subr.mxu0 %v1639
    %v1641 = vand.u32 %v792, 4294901760
    %1642 = vmatpush1.msra.mxu0 %v1641
    %v1643 = vand.u32 %v795, 4294901760
    %1644 = vmatprep.subr.mxu0 %v1643
    %v1645 = vand.u32 %v794, 4294901760
    %1646 = vmatpush1.msra.mxu0 %v1645
    %v1647 = vand.u32 %v797, 4294901760
    %1648 = vmatprep.subr.mxu0 %v1647
    %v1649 = vand.u32 %v796, 4294901760
    %1650 = vmatpush1.msra.mxu0 %v1649
    %v1651 = vand.u32 %v799, 4294901760
    %1652 = vmatprep.subr.mxu0 %v1651
    %v1653 = vand.u32 %v798, 4294901760
    %1654 = vmatpush1.msra.mxu0 %v1653
    %v1655 = vand.u32 %v801, 4294901760
    %1656 = vmatprep.subr.mxu0 %v1655
    %v1657 = vand.u32 %v800, 4294901760
    %1658 = vmatpush1.msra.mxu0 %v1657
    %v1659 = vand.u32 %v803, 4294901760
    %1660 = vmatprep.subr.mxu0 %v1659
    %v1661 = vand.u32 %v802, 4294901760
    %1662 = vmatpush1.msra.mxu0 %v1661
    %v1663 = vand.u32 %v805, 4294901760
    %1664 = vmatprep.subr.mxu0 %v1663
    %v1665 = vand.u32 %v804, 4294901760
    %1666 = vmatpush1.msra.mxu0 %v1665
    %v1667 = vand.u32 %v807, 4294901760
    %1668 = vmatprep.subr.mxu0 %v1667
    %v1669 = vand.u32 %v806, 4294901760
    %1670 = vmatpush1.msra.mxu0 %v1669
    %v1671 = vand.u32 %v809, 4294901760
    %1672 = vmatprep.subr.mxu0 %v1671
    %v1673 = vand.u32 %v808, 4294901760
    %1674 = vmatpush1.msra.mxu0 %v1673
    %v1675 = vand.u32 %v811, 4294901760
    %1676 = vmatprep.subr.mxu0 %v1675
    %v1677 = vand.u32 %v810, 4294901760
    %1678 = vmatpush1.msra.mxu0 %v1677
    %v1679 = vand.u32 %v813, 4294901760
    %1680 = vmatprep.subr.mxu0 %v1679
    %v1681 = vand.u32 %v812, 4294901760
    %1682 = vmatpush1.msra.mxu0 %v1681
    %v1683 = vand.u32 %v815, 4294901760
    %1684 = vmatprep.subr.mxu0 %v1683
    %v1685 = vand.u32 %v814, 4294901760
    %1686 = vmatpush1.msra.mxu0 %v1685
    %v1687 = vand.u32 %v817, 4294901760
    %1688 = vmatprep.subr.mxu0 %v1687
    %v1689 = vand.u32 %v816, 4294901760
    %1690 = vmatpush1.msra.mxu0 %v1689
    %v1691 = vand.u32 %v819, 4294901760
    %1692 = vmatprep.subr.mxu0 %v1691
    %v1693 = vand.u32 %v818, 4294901760
    %1694 = vmatpush1.msra.mxu0 %v1693
    %v1695 = vand.u32 %v821, 4294901760
    %1696 = vmatprep.subr.mxu0 %v1695
    %v1697 = vand.u32 %v820, 4294901760
    %1698 = vmatpush1.msra.mxu0 %v1697
    %v1699 = vand.u32 %v823, 4294901760
    %1700 = vmatprep.subr.mxu0 %v1699
    %v1701 = vand.u32 %v822, 4294901760
    %1702 = vmatpush1.msra.mxu0 %v1701
    %v1703 = vand.u32 %v825, 4294901760
    %1704 = vmatprep.subr.mxu0 %v1703
    %v1705 = vand.u32 %v824, 4294901760
    %1706 = vmatpush1.msra.mxu0 %v1705
    %v1707 = vand.u32 %v761, 4294901760
    %v1708 = vsub.f32 %v761, %v1707
    %v1709 = vand.u32 %v1708, 4294901760
    %1710 = vmatprep.mubr.f32.mxu0 %v1709
    %v1711 = vand.u32 %v760, 4294901760
    %v1712 = vsub.f32 %v760, %v1711
    %v1713 = vand.u32 %v1712, 4294901760
    %1714 = vmatmul.mubr.f32.gmra.mrb[0].mxu0 %v1713
    %v1715 = vpop.f32.mrb[0].mxu0
    %v1716 = vadd.f32 %v1575, %v1715
    %v1717 = vpop.f32.mrb[0].mxu0
    %v1718 = vadd.f32 %v1577, %v1717
    %1719 = vdwg.mxu0
    %v1720 = vand.u32 %v763, 4294901760
    %v1721 = vsub.f32 %v763, %v1720
    %v1722 = vand.u32 %v1721, 4294901760
    %1723 = vmatprep.subr.mxu0 %v1722
    %v1724 = vand.u32 %v762, 4294901760
    %v1725 = vsub.f32 %v762, %v1724
    %v1726 = vand.u32 %v1725, 4294901760
    %1727 = vmatpush1.msra.mxu0 %v1726
    %v1728 = vand.u32 %v765, 4294901760
    %v1729 = vsub.f32 %v765, %v1728
    %v1730 = vand.u32 %v1729, 4294901760
    %1731 = vmatprep.subr.mxu0 %v1730
    %v1732 = vand.u32 %v764, 4294901760
    %v1733 = vsub.f32 %v764, %v1732
    %v1734 = vand.u32 %v1733, 4294901760
    %1735 = vmatpush1.msra.mxu0 %v1734
    %v1736 = vand.u32 %v767, 4294901760
    %v1737 = vsub.f32 %v767, %v1736
    %v1738 = vand.u32 %v1737, 4294901760
    %1739 = vmatprep.subr.mxu0 %v1738
    %v1740 = vand.u32 %v766, 4294901760
    %v1741 = vsub.f32 %v766, %v1740
    %v1742 = vand.u32 %v1741, 4294901760
    %1743 = vmatpush1.msra.mxu0 %v1742
    %v1744 = vand.u32 %v769, 4294901760
    %v1745 = vsub.f32 %v769, %v1744
    %v1746 = vand.u32 %v1745, 4294901760
    %1747 = vmatprep.subr.mxu0 %v1746
    %v1748 = vand.u32 %v768, 4294901760
    %v1749 = vsub.f32 %v768, %v1748
    %v1750 = vand.u32 %v1749, 4294901760
    %1751 = vmatpush1.msra.mxu0 %v1750
    %v1752 = vand.u32 %v771, 4294901760
    %v1753 = vsub.f32 %v771, %v1752
    %v1754 = vand.u32 %v1753, 4294901760
    %1755 = vmatprep.subr.mxu0 %v1754
    %v1756 = vand.u32 %v770, 4294901760
    %v1757 = vsub.f32 %v770, %v1756
    %v1758 = vand.u32 %v1757, 4294901760
    %1759 = vmatpush1.msra.mxu0 %v1758
    %v1760 = vand.u32 %v773, 4294901760
    %v1761 = vsub.f32 %v773, %v1760
    %v1762 = vand.u32 %v1761, 4294901760
    %1763 = vmatprep.subr.mxu0 %v1762
    %v1764 = vand.u32 %v772, 4294901760
    %v1765 = vsub.f32 %v772, %v1764
    %v1766 = vand.u32 %v1765, 4294901760
    %1767 = vmatpush1.msra.mxu0 %v1766
    %v1768 = vand.u32 %v775, 4294901760
    %v1769 = vsub.f32 %v775, %v1768
    %v1770 = vand.u32 %v1769, 4294901760
    %1771 = vmatprep.subr.mxu0 %v1770
    %v1772 = vand.u32 %v774, 4294901760
    %v1773 = vsub.f32 %v774, %v1772
    %v1774 = vand.u32 %v1773, 4294901760
    %1775 = vmatpush1.msra.mxu0 %v1774
    %v1776 = vand.u32 %v777, 4294901760
    %v1777 = vsub.f32 %v777, %v1776
    %v1778 = vand.u32 %v1777, 4294901760
    %1779 = vmatprep.subr.mxu0 %v1778
    %v1780 = vand.u32 %v776, 4294901760
    %v1781 = vsub.f32 %v776, %v1780
    %v1782 = vand.u32 %v1781, 4294901760
    %1783 = vmatpush1.msra.mxu0 %v1782
    %v1784 = vand.u32 %v779, 4294901760
    %v1785 = vsub.f32 %v779, %v1784
    %v1786 = vand.u32 %v1785, 4294901760
    %1787 = vmatprep.subr.mxu0 %v1786
    %v1788 = vand.u32 %v778, 4294901760
    %v1789 = vsub.f32 %v778, %v1788
    %v1790 = vand.u32 %v1789, 4294901760
    %1791 = vmatpush1.msra.mxu0 %v1790
    %v1792 = vand.u32 %v781, 4294901760
    %v1793 = vsub.f32 %v781, %v1792
    %v1794 = vand.u32 %v1793, 4294901760
    %1795 = vmatprep.subr.mxu0 %v1794
    %v1796 = vand.u32 %v780, 4294901760
    %v1797 = vsub.f32 %v780, %v1796
    %v1798 = vand.u32 %v1797, 4294901760
    %1799 = vmatpush1.msra.mxu0 %v1798
    %v1800 = vand.u32 %v783, 4294901760
    %v1801 = vsub.f32 %v783, %v1800
    %v1802 = vand.u32 %v1801, 4294901760
    %1803 = vmatprep.subr.mxu0 %v1802
    %v1804 = vand.u32 %v782, 4294901760
    %v1805 = vsub.f32 %v782, %v1804
    %v1806 = vand.u32 %v1805, 4294901760
    %1807 = vmatpush1.msra.mxu0 %v1806
    %v1808 = vand.u32 %v785, 4294901760
    %v1809 = vsub.f32 %v785, %v1808
    %v1810 = vand.u32 %v1809, 4294901760
    %1811 = vmatprep.subr.mxu0 %v1810
    %v1812 = vand.u32 %v784, 4294901760
    %v1813 = vsub.f32 %v784, %v1812
    %v1814 = vand.u32 %v1813, 4294901760
    %1815 = vmatpush1.msra.mxu0 %v1814
    %v1816 = vand.u32 %v787, 4294901760
    %v1817 = vsub.f32 %v787, %v1816
    %v1818 = vand.u32 %v1817, 4294901760
    %1819 = vmatprep.subr.mxu0 %v1818
    %v1820 = vand.u32 %v786, 4294901760
    %v1821 = vsub.f32 %v786, %v1820
    %v1822 = vand.u32 %v1821, 4294901760
    %1823 = vmatpush1.msra.mxu0 %v1822
    %v1824 = vand.u32 %v789, 4294901760
    %v1825 = vsub.f32 %v789, %v1824
    %v1826 = vand.u32 %v1825, 4294901760
    %1827 = vmatprep.subr.mxu0 %v1826
    %v1828 = vand.u32 %v788, 4294901760
    %v1829 = vsub.f32 %v788, %v1828
    %v1830 = vand.u32 %v1829, 4294901760
    %1831 = vmatpush1.msra.mxu0 %v1830
    %v1832 = vand.u32 %v791, 4294901760
    %v1833 = vsub.f32 %v791, %v1832
    %v1834 = vand.u32 %v1833, 4294901760
    %1835 = vmatprep.subr.mxu0 %v1834
    %v1836 = vand.u32 %v790, 4294901760
    %v1837 = vsub.f32 %v790, %v1836
    %v1838 = vand.u32 %v1837, 4294901760
    %1839 = vmatpush1.msra.mxu0 %v1838
    %v1840 = vand.u32 %v793, 4294901760
    %v1841 = vsub.f32 %v793, %v1840
    %v1842 = vand.u32 %v1841, 4294901760
    %1843 = vmatprep.subr.mxu0 %v1842
    %v1844 = vand.u32 %v792, 4294901760
    %v1845 = vsub.f32 %v792, %v1844
    %v1846 = vand.u32 %v1845, 4294901760
    %1847 = vmatpush1.msra.mxu0 %v1846
    %v1848 = vand.u32 %v795, 4294901760
    %v1849 = vsub.f32 %v795, %v1848
    %v1850 = vand.u32 %v1849, 4294901760
    %1851 = vmatprep.subr.mxu0 %v1850
    %v1852 = vand.u32 %v794, 4294901760
    %v1853 = vsub.f32 %v794, %v1852
    %v1854 = vand.u32 %v1853, 4294901760
    %1855 = vmatpush1.msra.mxu0 %v1854
    %v1856 = vand.u32 %v797, 4294901760
    %v1857 = vsub.f32 %v797, %v1856
    %v1858 = vand.u32 %v1857, 4294901760
    %1859 = vmatprep.subr.mxu0 %v1858
    %v1860 = vand.u32 %v796, 4294901760
    %v1861 = vsub.f32 %v796, %v1860
    %v1862 = vand.u32 %v1861, 4294901760
    %1863 = vmatpush1.msra.mxu0 %v1862
    %v1864 = vand.u32 %v799, 4294901760
    %v1865 = vsub.f32 %v799, %v1864
    %v1866 = vand.u32 %v1865, 4294901760
    %1867 = vmatprep.subr.mxu0 %v1866
    %v1868 = vand.u32 %v798, 4294901760
    %v1869 = vsub.f32 %v798, %v1868
    %v1870 = vand.u32 %v1869, 4294901760
    %1871 = vmatpush1.msra.mxu0 %v1870
    %v1872 = vand.u32 %v801, 4294901760
    %v1873 = vsub.f32 %v801, %v1872
    %v1874 = vand.u32 %v1873, 4294901760
    %1875 = vmatprep.subr.mxu0 %v1874
    %v1876 = vand.u32 %v800, 4294901760
    %v1877 = vsub.f32 %v800, %v1876
    %v1878 = vand.u32 %v1877, 4294901760
    %1879 = vmatpush1.msra.mxu0 %v1878
    %v1880 = vand.u32 %v803, 4294901760
    %v1881 = vsub.f32 %v803, %v1880
    %v1882 = vand.u32 %v1881, 4294901760
    %1883 = vmatprep.subr.mxu0 %v1882
    %v1884 = vand.u32 %v802, 4294901760
    %v1885 = vsub.f32 %v802, %v1884
    %v1886 = vand.u32 %v1885, 4294901760
    %1887 = vmatpush1.msra.mxu0 %v1886
    %v1888 = vand.u32 %v805, 4294901760
    %v1889 = vsub.f32 %v805, %v1888
    %v1890 = vand.u32 %v1889, 4294901760
    %1891 = vmatprep.subr.mxu0 %v1890
    %v1892 = vand.u32 %v804, 4294901760
    %v1893 = vsub.f32 %v804, %v1892
    %v1894 = vand.u32 %v1893, 4294901760
    %1895 = vmatpush1.msra.mxu0 %v1894
    %v1896 = vand.u32 %v807, 4294901760
    %v1897 = vsub.f32 %v807, %v1896
    %v1898 = vand.u32 %v1897, 4294901760
    %1899 = vmatprep.subr.mxu0 %v1898
    %v1900 = vand.u32 %v806, 4294901760
    %v1901 = vsub.f32 %v806, %v1900
    %v1902 = vand.u32 %v1901, 4294901760
    %1903 = vmatpush1.msra.mxu0 %v1902
    %v1904 = vand.u32 %v809, 4294901760
    %v1905 = vsub.f32 %v809, %v1904
    %v1906 = vand.u32 %v1905, 4294901760
    %1907 = vmatprep.subr.mxu0 %v1906
    %v1908 = vand.u32 %v808, 4294901760
    %v1909 = vsub.f32 %v808, %v1908
    %v1910 = vand.u32 %v1909, 4294901760
    %1911 = vmatpush1.msra.mxu0 %v1910
    %v1912 = vand.u32 %v811, 4294901760
    %v1913 = vsub.f32 %v811, %v1912
    %v1914 = vand.u32 %v1913, 4294901760
    %1915 = vmatprep.subr.mxu0 %v1914
    %v1916 = vand.u32 %v810, 4294901760
    %v1917 = vsub.f32 %v810, %v1916
    %v1918 = vand.u32 %v1917, 4294901760
    %1919 = vmatpush1.msra.mxu0 %v1918
    %v1920 = vand.u32 %v813, 4294901760
    %v1921 = vsub.f32 %v813, %v1920
    %v1922 = vand.u32 %v1921, 4294901760
    %1923 = vmatprep.subr.mxu0 %v1922
    %v1924 = vand.u32 %v812, 4294901760
    %v1925 = vsub.f32 %v812, %v1924
    %v1926 = vand.u32 %v1925, 4294901760
    %1927 = vmatpush1.msra.mxu0 %v1926
    %v1928 = vand.u32 %v815, 4294901760
    %v1929 = vsub.f32 %v815, %v1928
    %v1930 = vand.u32 %v1929, 4294901760
    %1931 = vmatprep.subr.mxu0 %v1930
    %v1932 = vand.u32 %v814, 4294901760
    %v1933 = vsub.f32 %v814, %v1932
    %v1934 = vand.u32 %v1933, 4294901760
    %1935 = vmatpush1.msra.mxu0 %v1934
    %v1936 = vand.u32 %v817, 4294901760
    %v1937 = vsub.f32 %v817, %v1936
    %v1938 = vand.u32 %v1937, 4294901760
    %1939 = vmatprep.subr.mxu0 %v1938
    %v1940 = vand.u32 %v816, 4294901760
    %v1941 = vsub.f32 %v816, %v1940
    %v1942 = vand.u32 %v1941, 4294901760
    %1943 = vmatpush1.msra.mxu0 %v1942
    %v1944 = vand.u32 %v819, 4294901760
    %v1945 = vsub.f32 %v819, %v1944
    %v1946 = vand.u32 %v1945, 4294901760
    %1947 = vmatprep.subr.mxu0 %v1946
    %v1948 = vand.u32 %v818, 4294901760
    %v1949 = vsub.f32 %v818, %v1948
    %v1950 = vand.u32 %v1949, 4294901760
    %1951 = vmatpush1.msra.mxu0 %v1950
    %v1952 = vand.u32 %v821, 4294901760
    %v1953 = vsub.f32 %v821, %v1952
    %v1954 = vand.u32 %v1953, 4294901760
    %1955 = vmatprep.subr.mxu0 %v1954
    %v1956 = vand.u32 %v820, 4294901760
    %v1957 = vsub.f32 %v820, %v1956
    %v1958 = vand.u32 %v1957, 4294901760
    %1959 = vmatpush1.msra.mxu0 %v1958
    %v1960 = vand.u32 %v823, 4294901760
    %v1961 = vsub.f32 %v823, %v1960
    %v1962 = vand.u32 %v1961, 4294901760
    %1963 = vmatprep.subr.mxu0 %v1962
    %v1964 = vand.u32 %v822, 4294901760
    %v1965 = vsub.f32 %v822, %v1964
    %v1966 = vand.u32 %v1965, 4294901760
    %1967 = vmatpush1.msra.mxu0 %v1966
    %v1968 = vand.u32 %v825, 4294901760
    %v1969 = vsub.f32 %v825, %v1968
    %v1970 = vand.u32 %v1969, 4294901760
    %1971 = vmatprep.subr.mxu0 %v1970
    %v1972 = vand.u32 %v824, 4294901760
    %v1973 = vsub.f32 %v824, %v1972
    %v1974 = vand.u32 %v1973, 4294901760
    %1975 = vmatpush1.msra.mxu0 %v1974
    %v1976 = vand.u32 %v761, 4294901760
    %1977 = vmatprep.mubr.f32.mxu0 %v1976
    %v1978 = vand.u32 %v760, 4294901760
    %1979 = vmatmul.mubr.f32.gmra.mrb[0].mxu0 %v1978
    %v1980 = vpop.f32.mrb[0].mxu0
    %v1981 = vadd.f32 %v1716, %v1980
    %v1982 = vpop.f32.mrb[0].mxu0
    %v1983 = vadd.f32 %v1718, %v1982
    %1984 = vdwg.mxu0
    %v1985 = vand.u32 %v763, 4294901760
    %1986 = vmatprep.subr.mxu0 %v1985
    %v1987 = vand.u32 %v762, 4294901760
    %1988 = vmatpush1.msra.mxu0 %v1987
    %v1989 = vand.u32 %v765, 4294901760
    %1990 = vmatprep.subr.mxu0 %v1989
    %v1991 = vand.u32 %v764, 4294901760
    %1992 = vmatpush1.msra.mxu0 %v1991
    %v1993 = vand.u32 %v767, 4294901760
    %1994 = vmatprep.subr.mxu0 %v1993
    %v1995 = vand.u32 %v766, 4294901760
    %1996 = vmatpush1.msra.mxu0 %v1995
    %v1997 = vand.u32 %v769, 4294901760
    %1998 = vmatprep.subr.mxu0 %v1997
    %v1999 = vand.u32 %v768, 4294901760
    %2000 = vmatpush1.msra.mxu0 %v1999
    %v2001 = vand.u32 %v771, 4294901760
    %2002 = vmatprep.subr.mxu0 %v2001
    %v2003 = vand.u32 %v770, 4294901760
    %2004 = vmatpush1.msra.mxu0 %v2003
    %v2005 = vand.u32 %v773, 4294901760
    %2006 = vmatprep.subr.mxu0 %v2005
    %v2007 = vand.u32 %v772, 4294901760
    %2008 = vmatpush1.msra.mxu0 %v2007
    %v2009 = vand.u32 %v775, 4294901760
    %2010 = vmatprep.subr.mxu0 %v2009
    %v2011 = vand.u32 %v774, 4294901760
    %2012 = vmatpush1.msra.mxu0 %v2011
    %v2013 = vand.u32 %v777, 4294901760
    %2014 = vmatprep.subr.mxu0 %v2013
    %v2015 = vand.u32 %v776, 4294901760
    %2016 = vmatpush1.msra.mxu0 %v2015
    %v2017 = vand.u32 %v779, 4294901760
    %2018 = vmatprep.subr.mxu0 %v2017
    %v2019 = vand.u32 %v778, 4294901760
    %2020 = vmatpush1.msra.mxu0 %v2019
    %v2021 = vand.u32 %v781, 4294901760
    %2022 = vmatprep.subr.mxu0 %v2021
    %v2023 = vand.u32 %v780, 4294901760
    %2024 = vmatpush1.msra.mxu0 %v2023
    %v2025 = vand.u32 %v783, 4294901760
    %2026 = vmatprep.subr.mxu0 %v2025
    %v2027 = vand.u32 %v782, 4294901760
    %2028 = vmatpush1.msra.mxu0 %v2027
    %v2029 = vand.u32 %v785, 4294901760
    %2030 = vmatprep.subr.mxu0 %v2029
    %v2031 = vand.u32 %v784, 4294901760
    %2032 = vmatpush1.msra.mxu0 %v2031
    %v2033 = vand.u32 %v787, 4294901760
    %2034 = vmatprep.subr.mxu0 %v2033
    %v2035 = vand.u32 %v786, 4294901760
    %2036 = vmatpush1.msra.mxu0 %v2035
    %v2037 = vand.u32 %v789, 4294901760
    %2038 = vmatprep.subr.mxu0 %v2037
    %v2039 = vand.u32 %v788, 4294901760
    %2040 = vmatpush1.msra.mxu0 %v2039
    %v2041 = vand.u32 %v791, 4294901760
    %2042 = vmatprep.subr.mxu0 %v2041
    %v2043 = vand.u32 %v790, 4294901760
    %2044 = vmatpush1.msra.mxu0 %v2043
    %v2045 = vand.u32 %v793, 4294901760
    %2046 = vmatprep.subr.mxu0 %v2045
    %v2047 = vand.u32 %v792, 4294901760
    %2048 = vmatpush1.msra.mxu0 %v2047
    %v2049 = vand.u32 %v795, 4294901760
    %2050 = vmatprep.subr.mxu0 %v2049
    %v2051 = vand.u32 %v794, 4294901760
    %2052 = vmatpush1.msra.mxu0 %v2051
    %v2053 = vand.u32 %v797, 4294901760
    %2054 = vmatprep.subr.mxu0 %v2053
    %v2055 = vand.u32 %v796, 4294901760
    %2056 = vmatpush1.msra.mxu0 %v2055
    %v2057 = vand.u32 %v799, 4294901760
    %2058 = vmatprep.subr.mxu0 %v2057
    %v2059 = vand.u32 %v798, 4294901760
    %2060 = vmatpush1.msra.mxu0 %v2059
    %v2061 = vand.u32 %v801, 4294901760
    %2062 = vmatprep.subr.mxu0 %v2061
    %v2063 = vand.u32 %v800, 4294901760
    %2064 = vmatpush1.msra.mxu0 %v2063
    %v2065 = vand.u32 %v803, 4294901760
    %2066 = vmatprep.subr.mxu0 %v2065
    %v2067 = vand.u32 %v802, 4294901760
    %2068 = vmatpush1.msra.mxu0 %v2067
    %v2069 = vand.u32 %v805, 4294901760
    %2070 = vmatprep.subr.mxu0 %v2069
    %v2071 = vand.u32 %v804, 4294901760
    %2072 = vmatpush1.msra.mxu0 %v2071
    %v2073 = vand.u32 %v807, 4294901760
    %2074 = vmatprep.subr.mxu0 %v2073
    %v2075 = vand.u32 %v806, 4294901760
    %2076 = vmatpush1.msra.mxu0 %v2075
    %v2077 = vand.u32 %v809, 4294901760
    %2078 = vmatprep.subr.mxu0 %v2077
    %v2079 = vand.u32 %v808, 4294901760
    %2080 = vmatpush1.msra.mxu0 %v2079
    %v2081 = vand.u32 %v811, 4294901760
    %2082 = vmatprep.subr.mxu0 %v2081
    %v2083 = vand.u32 %v810, 4294901760
    %2084 = vmatpush1.msra.mxu0 %v2083
    %v2085 = vand.u32 %v813, 4294901760
    %2086 = vmatprep.subr.mxu0 %v2085
    %v2087 = vand.u32 %v812, 4294901760
    %2088 = vmatpush1.msra.mxu0 %v2087
    %v2089 = vand.u32 %v815, 4294901760
    %2090 = vmatprep.subr.mxu0 %v2089
    %v2091 = vand.u32 %v814, 4294901760
    %2092 = vmatpush1.msra.mxu0 %v2091
    %v2093 = vand.u32 %v817, 4294901760
    %2094 = vmatprep.subr.mxu0 %v2093
    %v2095 = vand.u32 %v816, 4294901760
    %2096 = vmatpush1.msra.mxu0 %v2095
    %v2097 = vand.u32 %v819, 4294901760
    %2098 = vmatprep.subr.mxu0 %v2097
    %v2099 = vand.u32 %v818, 4294901760
    %2100 = vmatpush1.msra.mxu0 %v2099
    %v2101 = vand.u32 %v821, 4294901760
    %2102 = vmatprep.subr.mxu0 %v2101
    %v2103 = vand.u32 %v820, 4294901760
    %2104 = vmatpush1.msra.mxu0 %v2103
    %v2105 = vand.u32 %v823, 4294901760
    %2106 = vmatprep.subr.mxu0 %v2105
    %v2107 = vand.u32 %v822, 4294901760
    %2108 = vmatpush1.msra.mxu0 %v2107
    %v2109 = vand.u32 %v825, 4294901760
    %2110 = vmatprep.subr.mxu0 %v2109
    %v2111 = vand.u32 %v824, 4294901760
    %2112 = vmatpush1.msra.mxu0 %v2111
    %v2113 = vand.u32 %v761, 4294901760
    %2114 = vmatprep.mubr.f32.mxu0 %v2113
    %v2115 = vand.u32 %v760, 4294901760
    %2116 = vmatmul.mubr.f32.gmra.mrb[0].mxu0 %v2115
    %v2117 = vpop.f32.mrb[0].mxu0
    %v2118 = vadd.f32 %v1981, %v2117
    %v2119 = vpop.f32.mrb[0].mxu0
    %v2120 = vadd.f32 %v1983, %v2119
    %2121 = vdwg.mxu0
    %v2122 = vmax.f32 %v2118, 0.0
    %v2123 = vmax.f32 %v2120, 0.0
    %v2124 = vld [vmem:[#allocation8] sm:$0xff]
    %v2125 = vld [vmem:[#allocation8 + $0x8] sm:$0xff]
    %v2126 = vld [vmem:[#allocation8 + $0x10] sm:$0xff]
    %v2127 = vld [vmem:[#allocation8 + $0x18] sm:$0xff]
    %v2128 = vld [vmem:[#allocation8 + $0x20] sm:$0xff]
    %v2129 = vld [vmem:[#allocation8 + $0x28] sm:$0xff]
    %v2130 = vld [vmem:[#allocation8 + $0x30] sm:$0xff]
    %v2131 = vld [vmem:[#allocation8 + $0x38] sm:$0xff]
    %v2132 = vld [vmem:[#allocation8 + $0x40] sm:$0xff]
    %v2133 = vld [vmem:[#allocation8 + $0x48] sm:$0xff]
    %v2134 = vld [vmem:[#allocation8 + $0x50] sm:$0xff]
    %v2135 = vld [vmem:[#allocation8 + $0x58] sm:$0xff]
    %v2136 = vld [vmem:[#allocation8 + $0x60] sm:$0xff]
    %v2137 = vld [vmem:[#allocation8 + $0x68] sm:$0xff]
    %v2138 = vld [vmem:[#allocation8 + $0x70] sm:$0xff]
    %v2139 = vld [vmem:[#allocation8 + $0x78] sm:$0xff]
    %v2140 = vld [vmem:[#allocation8 + $0x80] sm:$0xff]
    %v2141 = vld [vmem:[#allocation8 + $0x88] sm:$0xff]
    %v2142 = vld [vmem:[#allocation8 + $0x90] sm:$0xff]
    %v2143 = vld [vmem:[#allocation8 + $0x98] sm:$0xff]
    %v2144 = vld [vmem:[#allocation8 + $0xa0] sm:$0xff]
    %v2145 = vld [vmem:[#allocation8 + $0xa8] sm:$0xff]
    %v2146 = vld [vmem:[#allocation8 + $0xb0] sm:$0xff]
    %v2147 = vld [vmem:[#allocation8 + $0xb8] sm:$0xff]
    %v2148 = vld [vmem:[#allocation8 + $0xc0] sm:$0xff]
    %v2149 = vld [vmem:[#allocation8 + $0xc8] sm:$0xff]
    %v2150 = vld [vmem:[#allocation8 + $0xd0] sm:$0xff]
    %v2151 = vld [vmem:[#allocation8 + $0xd8] sm:$0xff]
    %v2152 = vld [vmem:[#allocation8 + $0xe0] sm:$0xff]
    %v2153 = vld [vmem:[#allocation8 + $0xe8] sm:$0xff]
    %v2154 = vld [vmem:[#allocation8 + $0xf0] sm:$0xff]
    %v2155 = vld [vmem:[#allocation8 + $0xf8] sm:$0xff]
    %v2156 = vld [vmem:[%s6] sm:$0x1]
    %v2158 = vlaneseq
    %v2159 = vshrl.u32 %v2158, 7
    %v2160 = vsub.s32 0, %v2159
    %v2161 = vrot.slane %v2156, %v2160
    %2163 = vmatprep.subr.mxu0 0.0
    %v2164 = vand.u32 %v2124, 4294901760
    %2165 = vmatpush1.msra.mxu0 %v2164
    %2166 = vmatprep.subr.mxu0 0.0
    %v2167 = vand.u32 %v2125, 4294901760
    %2168 = vmatpush1.msra.mxu0 %v2167
    %2169 = vmatprep.subr.mxu0 0.0
    %v2170 = vand.u32 %v2126, 4294901760
    %2171 = vmatpush1.msra.mxu0 %v2170
    %2172 = vmatprep.subr.mxu0 0.0
    %v2173 = vand.u32 %v2127, 4294901760
    %2174 = vmatpush1.msra.mxu0 %v2173
    %2175 = vmatprep.subr.mxu0 0.0
    %v2176 = vand.u32 %v2128, 4294901760
    %2177 = vmatpush1.msra.mxu0 %v2176
    %2178 = vmatprep.subr.mxu0 0.0
    %v2179 = vand.u32 %v2129, 4294901760
    %2180 = vmatpush1.msra.mxu0 %v2179
    %2181 = vmatprep.subr.mxu0 0.0
    %v2182 = vand.u32 %v2130, 4294901760
    %2183 = vmatpush1.msra.mxu0 %v2182
    %2184 = vmatprep.subr.mxu0 0.0
    %v2185 = vand.u32 %v2131, 4294901760
    %2186 = vmatpush1.msra.mxu0 %v2185
    %2187 = vmatprep.subr.mxu0 0.0
    %v2188 = vand.u32 %v2132, 4294901760
    %2189 = vmatpush1.msra.mxu0 %v2188
    %2190 = vmatprep.subr.mxu0 0.0
    %v2191 = vand.u32 %v2133, 4294901760
    %2192 = vmatpush1.msra.mxu0 %v2191
    %2193 = vmatprep.subr.mxu0 0.0
    %v2194 = vand.u32 %v2134, 4294901760
    %2195 = vmatpush1.msra.mxu0 %v2194
    %2196 = vmatprep.subr.mxu0 0.0
    %v2197 = vand.u32 %v2135, 4294901760
    %2198 = vmatpush1.msra.mxu0 %v2197
    %2199 = vmatprep.subr.mxu0 0.0
    %v2200 = vand.u32 %v2136, 4294901760
    %2201 = vmatpush1.msra.mxu0 %v2200
    %2202 = vmatprep.subr.mxu0 0.0
    %v2203 = vand.u32 %v2137, 4294901760
    %2204 = vmatpush1.msra.mxu0 %v2203
    %2205 = vmatprep.subr.mxu0 0.0
    %v2206 = vand.u32 %v2138, 4294901760
    %2207 = vmatpush1.msra.mxu0 %v2206
    %2208 = vmatprep.subr.mxu0 0.0
    %v2209 = vand.u32 %v2139, 4294901760
    %2210 = vmatpush1.msra.mxu0 %v2209
    %2211 = vmatprep.subr.mxu0 0.0
    %v2212 = vand.u32 %v2140, 4294901760
    %2213 = vmatpush1.msra.mxu0 %v2212
    %2214 = vmatprep.subr.mxu0 0.0
    %v2215 = vand.u32 %v2141, 4294901760
    %2216 = vmatpush1.msra.mxu0 %v2215
    %2217 = vmatprep.subr.mxu0 0.0
    %v2218 = vand.u32 %v2142, 4294901760
    %2219 = vmatpush1.msra.mxu0 %v2218
    %2220 = vmatprep.subr.mxu0 0.0
    %v2221 = vand.u32 %v2143, 4294901760
    %2222 = vmatpush1.msra.mxu0 %v2221
    %2223 = vmatprep.subr.mxu0 0.0
    %v2224 = vand.u32 %v2144, 4294901760
    %2225 = vmatpush1.msra.mxu0 %v2224
    %2226 = vmatprep.subr.mxu0 0.0
    %v2227 = vand.u32 %v2145, 4294901760
    %2228 = vmatpush1.msra.mxu0 %v2227
    %2229 = vmatprep.subr.mxu0 0.0
    %v2230 = vand.u32 %v2146, 4294901760
    %2231 = vmatpush1.msra.mxu0 %v2230
    %2232 = vmatprep.subr.mxu0 0.0
    %v2233 = vand.u32 %v2147, 4294901760
    %2234 = vmatpush1.msra.mxu0 %v2233
    %2235 = vmatprep.subr.mxu0 0.0
    %v2236 = vand.u32 %v2148, 4294901760
    %2237 = vmatpush1.msra.mxu0 %v2236
    %2238 = vmatprep.subr.mxu0 0.0
    %v2239 = vand.u32 %v2149, 4294901760
    %2240 = vmatpush1.msra.mxu0 %v2239
    %2241 = vmatprep.subr.mxu0 0.0
    %v2242 = vand.u32 %v2150, 4294901760
    %2243 = vmatpush1.msra.mxu0 %v2242
    %2244 = vmatprep.subr.mxu0 0.0
    %v2245 = vand.u32 %v2151, 4294901760
    %2246 = vmatpush1.msra.mxu0 %v2245
    %2247 = vmatprep.subr.mxu0 0.0
    %v2248 = vand.u32 %v2152, 4294901760
    %2249 = vmatpush1.msra.mxu0 %v2248
    %2250 = vmatprep.subr.mxu0 0.0
    %v2251 = vand.u32 %v2153, 4294901760
    %2252 = vmatpush1.msra.mxu0 %v2251
    %2253 = vmatprep.subr.mxu0 0.0
    %v2254 = vand.u32 %v2154, 4294901760
    %2255 = vmatpush1.msra.mxu0 %v2254
    %2256 = vmatprep.subr.mxu0 0.0
    %v2257 = vand.u32 %v2155, 4294901760
    %2258 = vmatpush1.msra.mxu0 %v2257
    %v2259 = vand.u32 %v2123, 4294901760
    %v2260 = vsub.f32 %v2123, %v2259
    %v2261 = vand.u32 %v2260, 4294901760
    %v2262 = vsub.f32 %v2260, %v2261
    %v2263 = vand.u32 %v2262, 4294901760
    %2264 = vmatprep.mubr.f32.mxu0 %v2263
    %v2265 = vand.u32 %v2122, 4294901760
    %v2266 = vsub.f32 %v2122, %v2265
    %v2267 = vand.u32 %v2266, 4294901760
    %v2268 = vsub.f32 %v2266, %v2267
    %v2269 = vand.u32 %v2268, 4294901760
    %2270 = vmatmul.mubr.f32.gmra.mrb[0].mxu0 %v2269
    %v2271 = vpop.f32.mrb[0].mxu0
    %v2272 = vadd.f32 %v2161, %v2271
    %v2273 = vpop.f32.mrb[0].mxu0
    %2274 = vdwg.mxu0
    %2275 = vmatprep.subr.mxu0 0.0
    %v2276 = vand.u32 %v2124, 4294901760
    %v2277 = vsub.f32 %v2124, %v2276
    %v2278 = vand.u32 %v2277, 4294901760
    %v2279 = vsub.f32 %v2277, %v2278
    %v2280 = vand.u32 %v2279, 4294901760
    %2281 = vmatpush1.msra.mxu0 %v2280
    %2282 = vmatprep.subr.mxu0 0.0
    %v2283 = vand.u32 %v2125, 4294901760
    %v2284 = vsub.f32 %v2125, %v2283
    %v2285 = vand.u32 %v2284, 4294901760
    %v2286 = vsub.f32 %v2284, %v2285
    %v2287 = vand.u32 %v2286, 4294901760
    %2288 = vmatpush1.msra.mxu0 %v2287
    %2289 = vmatprep.subr.mxu0 0.0
    %v2290 = vand.u32 %v2126, 4294901760
    %v2291 = vsub.f32 %v2126, %v2290
    %v2292 = vand.u32 %v2291, 4294901760
    %v2293 = vsub.f32 %v2291, %v2292
    %v2294 = vand.u32 %v2293, 4294901760
    %2295 = vmatpush1.msra.mxu0 %v2294
    %2296 = vmatprep.subr.mxu0 0.0
    %v2297 = vand.u32 %v2127, 4294901760
    %v2298 = vsub.f32 %v2127, %v2297
    %v2299 = vand.u32 %v2298, 4294901760
    %v2300 = vsub.f32 %v2298, %v2299
    %v2301 = vand.u32 %v2300, 4294901760
    %2302 = vmatpush1.msra.mxu0 %v2301
    %2303 = vmatprep.subr.mxu0 0.0
    %v2304 = vand.u32 %v2128, 4294901760
    %v2305 = vsub.f32 %v2128, %v2304
    %v2306 = vand.u32 %v2305, 4294901760
    %v2307 = vsub.f32 %v2305, %v2306
    %v2308 = vand.u32 %v2307, 4294901760
    %2309 = vmatpush1.msra.mxu0 %v2308
    %2310 = vmatprep.subr.mxu0 0.0
    %v2311 = vand.u32 %v2129, 4294901760
    %v2312 = vsub.f32 %v2129, %v2311
    %v2313 = vand.u32 %v2312, 4294901760
    %v2314 = vsub.f32 %v2312, %v2313
    %v2315 = vand.u32 %v2314, 4294901760
    %2316 = vmatpush1.msra.mxu0 %v2315
    %2317 = vmatprep.subr.mxu0 0.0
    %v2318 = vand.u32 %v2130, 4294901760
    %v2319 = vsub.f32 %v2130, %v2318
    %v2320 = vand.u32 %v2319, 4294901760
    %v2321 = vsub.f32 %v2319, %v2320
    %v2322 = vand.u32 %v2321, 4294901760
    %2323 = vmatpush1.msra.mxu0 %v2322
    %2324 = vmatprep.subr.mxu0 0.0
    %v2325 = vand.u32 %v2131, 4294901760
    %v2326 = vsub.f32 %v2131, %v2325
    %v2327 = vand.u32 %v2326, 4294901760
    %v2328 = vsub.f32 %v2326, %v2327
    %v2329 = vand.u32 %v2328, 4294901760
    %2330 = vmatpush1.msra.mxu0 %v2329
    %2331 = vmatprep.subr.mxu0 0.0
    %v2332 = vand.u32 %v2132, 4294901760
    %v2333 = vsub.f32 %v2132, %v2332
    %v2334 = vand.u32 %v2333, 4294901760
    %v2335 = vsub.f32 %v2333, %v2334
    %v2336 = vand.u32 %v2335, 4294901760
    %2337 = vmatpush1.msra.mxu0 %v2336
    %2338 = vmatprep.subr.mxu0 0.0
    %v2339 = vand.u32 %v2133, 4294901760
    %v2340 = vsub.f32 %v2133, %v2339
    %v2341 = vand.u32 %v2340, 4294901760
    %v2342 = vsub.f32 %v2340, %v2341
    %v2343 = vand.u32 %v2342, 4294901760
    %2344 = vmatpush1.msra.mxu0 %v2343
    %2345 = vmatprep.subr.mxu0 0.0
    %v2346 = vand.u32 %v2134, 4294901760
    %v2347 = vsub.f32 %v2134, %v2346
    %v2348 = vand.u32 %v2347, 4294901760
    %v2349 = vsub.f32 %v2347, %v2348
    %v2350 = vand.u32 %v2349, 4294901760
    %2351 = vmatpush1.msra.mxu0 %v2350
    %2352 = vmatprep.subr.mxu0 0.0
    %v2353 = vand.u32 %v2135, 4294901760
    %v2354 = vsub.f32 %v2135, %v2353
    %v2355 = vand.u32 %v2354, 4294901760
    %v2356 = vsub.f32 %v2354, %v2355
    %v2357 = vand.u32 %v2356, 4294901760
    %2358 = vmatpush1.msra.mxu0 %v2357
    %2359 = vmatprep.subr.mxu0 0.0
    %v2360 = vand.u32 %v2136, 4294901760
    %v2361 = vsub.f32 %v2136, %v2360
    %v2362 = vand.u32 %v2361, 4294901760
    %v2363 = vsub.f32 %v2361, %v2362
    %v2364 = vand.u32 %v2363, 4294901760
    %2365 = vmatpush1.msra.mxu0 %v2364
    %2366 = vmatprep.subr.mxu0 0.0
    %v2367 = vand.u32 %v2137, 4294901760
    %v2368 = vsub.f32 %v2137, %v2367
    %v2369 = vand.u32 %v2368, 4294901760
    %v2370 = vsub.f32 %v2368, %v2369
    %v2371 = vand.u32 %v2370, 4294901760
    %2372 = vmatpush1.msra.mxu0 %v2371
    %2373 = vmatprep.subr.mxu0 0.0
    %v2374 = vand.u32 %v2138, 4294901760
    %v2375 = vsub.f32 %v2138, %v2374
    %v2376 = vand.u32 %v2375, 4294901760
    %v2377 = vsub.f32 %v2375, %v2376
    %v2378 = vand.u32 %v2377, 4294901760
    %2379 = vmatpush1.msra.mxu0 %v2378
    %2380 = vmatprep.subr.mxu0 0.0
    %v2381 = vand.u32 %v2139, 4294901760
    %v2382 = vsub.f32 %v2139, %v2381
    %v2383 = vand.u32 %v2382, 4294901760
    %v2384 = vsub.f32 %v2382, %v2383
    %v2385 = vand.u32 %v2384, 4294901760
    %2386 = vmatpush1.msra.mxu0 %v2385
    %2387 = vmatprep.subr.mxu0 0.0
    %v2388 = vand.u32 %v2140, 4294901760
    %v2389 = vsub.f32 %v2140, %v2388
    %v2390 = vand.u32 %v2389, 4294901760
    %v2391 = vsub.f32 %v2389, %v2390
    %v2392 = vand.u32 %v2391, 4294901760
    %2393 = vmatpush1.msra.mxu0 %v2392
    %2394 = vmatprep.subr.mxu0 0.0
    %v2395 = vand.u32 %v2141, 4294901760
    %v2396 = vsub.f32 %v2141, %v2395
    %v2397 = vand.u32 %v2396, 4294901760
    %v2398 = vsub.f32 %v2396, %v2397
    %v2399 = vand.u32 %v2398, 4294901760
    %2400 = vmatpush1.msra.mxu0 %v2399
    %2401 = vmatprep.subr.mxu0 0.0
    %v2402 = vand.u32 %v2142, 4294901760
    %v2403 = vsub.f32 %v2142, %v2402
    %v2404 = vand.u32 %v2403, 4294901760
    %v2405 = vsub.f32 %v2403, %v2404
    %v2406 = vand.u32 %v2405, 4294901760
    %2407 = vmatpush1.msra.mxu0 %v2406
    %2408 = vmatprep.subr.mxu0 0.0
    %v2409 = vand.u32 %v2143, 4294901760
    %v2410 = vsub.f32 %v2143, %v2409
    %v2411 = vand.u32 %v2410, 4294901760
    %v2412 = vsub.f32 %v2410, %v2411
    %v2413 = vand.u32 %v2412, 4294901760
    %2414 = vmatpush1.msra.mxu0 %v2413
    %2415 = vmatprep.subr.mxu0 0.0
    %v2416 = vand.u32 %v2144, 4294901760
    %v2417 = vsub.f32 %v2144, %v2416
    %v2418 = vand.u32 %v2417, 4294901760
    %v2419 = vsub.f32 %v2417, %v2418
    %v2420 = vand.u32 %v2419, 4294901760
    %2421 = vmatpush1.msra.mxu0 %v2420
    %2422 = vmatprep.subr.mxu0 0.0
    %v2423 = vand.u32 %v2145, 4294901760
    %v2424 = vsub.f32 %v2145, %v2423
    %v2425 = vand.u32 %v2424, 4294901760
    %v2426 = vsub.f32 %v2424, %v2425
    %v2427 = vand.u32 %v2426, 4294901760
    %2428 = vmatpush1.msra.mxu0 %v2427
    %2429 = vmatprep.subr.mxu0 0.0
    %v2430 = vand.u32 %v2146, 4294901760
    %v2431 = vsub.f32 %v2146, %v2430
    %v2432 = vand.u32 %v2431, 4294901760
    %v2433 = vsub.f32 %v2431, %v2432
    %v2434 = vand.u32 %v2433, 4294901760
    %2435 = vmatpush1.msra.mxu0 %v2434
    %2436 = vmatprep.subr.mxu0 0.0
    %v2437 = vand.u32 %v2147, 4294901760
    %v2438 = vsub.f32 %v2147, %v2437
    %v2439 = vand.u32 %v2438, 4294901760
    %v2440 = vsub.f32 %v2438, %v2439
    %v2441 = vand.u32 %v2440, 4294901760
    %2442 = vmatpush1.msra.mxu0 %v2441
    %2443 = vmatprep.subr.mxu0 0.0
    %v2444 = vand.u32 %v2148, 4294901760
    %v2445 = vsub.f32 %v2148, %v2444
    %v2446 = vand.u32 %v2445, 4294901760
    %v2447 = vsub.f32 %v2445, %v2446
    %v2448 = vand.u32 %v2447, 4294901760
    %2449 = vmatpush1.msra.mxu0 %v2448
    %2450 = vmatprep.subr.mxu0 0.0
    %v2451 = vand.u32 %v2149, 4294901760
    %v2452 = vsub.f32 %v2149, %v2451
    %v2453 = vand.u32 %v2452, 4294901760
    %v2454 = vsub.f32 %v2452, %v2453
    %v2455 = vand.u32 %v2454, 4294901760
    %2456 = vmatpush1.msra.mxu0 %v2455
    %2457 = vmatprep.subr.mxu0 0.0
    %v2458 = vand.u32 %v2150, 4294901760
    %v2459 = vsub.f32 %v2150, %v2458
    %v2460 = vand.u32 %v2459, 4294901760
    %v2461 = vsub.f32 %v2459, %v2460
    %v2462 = vand.u32 %v2461, 4294901760
    %2463 = vmatpush1.msra.mxu0 %v2462
    %2464 = vmatprep.subr.mxu0 0.0
    %v2465 = vand.u32 %v2151, 4294901760
    %v2466 = vsub.f32 %v2151, %v2465
    %v2467 = vand.u32 %v2466, 4294901760
    %v2468 = vsub.f32 %v2466, %v2467
    %v2469 = vand.u32 %v2468, 4294901760
    %2470 = vmatpush1.msra.mxu0 %v2469
    %2471 = vmatprep.subr.mxu0 0.0
    %v2472 = vand.u32 %v2152, 4294901760
    %v2473 = vsub.f32 %v2152, %v2472
    %v2474 = vand.u32 %v2473, 4294901760
    %v2475 = vsub.f32 %v2473, %v2474
    %v2476 = vand.u32 %v2475, 4294901760
    %2477 = vmatpush1.msra.mxu0 %v2476
    %2478 = vmatprep.subr.mxu0 0.0
    %v2479 = vand.u32 %v2153, 4294901760
    %v2480 = vsub.f32 %v2153, %v2479
    %v2481 = vand.u32 %v2480, 4294901760
    %v2482 = vsub.f32 %v2480, %v2481
    %v2483 = vand.u32 %v2482, 4294901760
    %2484 = vmatpush1.msra.mxu0 %v2483
    %2485 = vmatprep.subr.mxu0 0.0
    %v2486 = vand.u32 %v2154, 4294901760
    %v2487 = vsub.f32 %v2154, %v2486
    %v2488 = vand.u32 %v2487, 4294901760
    %v2489 = vsub.f32 %v2487, %v2488
    %v2490 = vand.u32 %v2489, 4294901760
    %2491 = vmatpush1.msra.mxu0 %v2490
    %2492 = vmatprep.subr.mxu0 0.0
    %v2493 = vand.u32 %v2155, 4294901760
    %v2494 = vsub.f32 %v2155, %v2493
    %v2495 = vand.u32 %v2494, 4294901760
    %v2496 = vsub.f32 %v2494, %v2495
    %v2497 = vand.u32 %v2496, 4294901760
    %2498 = vmatpush1.msra.mxu0 %v2497
    %v2499 = vand.u32 %v2123, 4294901760
    %2500 = vmatprep.mubr.f32.mxu0 %v2499
    %v2501 = vand.u32 %v2122, 4294901760
    %2502 = vmatmul.mubr.f32.gmra.mrb[0].mxu0 %v2501
    %v2503 = vpop.f32.mrb[0].mxu0
    %v2504 = vadd.f32 %v2272, %v2503
    %v2505 = vpop.f32.mrb[0].mxu0
    %2506 = vdwg.mxu0
    %2507 = vmatprep.subr.mxu0 0.0
    %v2508 = vand.u32 %v2124, 4294901760
    %v2509 = vsub.f32 %v2124, %v2508
    %2510 = vmatpush1.msra.mxu0 %v2509
    %2511 = vmatprep.subr.mxu0 0.0
    %v2512 = vand.u32 %v2125, 4294901760
    %v2513 = vsub.f32 %v2125, %v2512
    %2514 = vmatpush1.msra.mxu0 %v2513
    %2515 = vmatprep.subr.mxu0 0.0
    %v2516 = vand.u32 %v2126, 4294901760
    %v2517 = vsub.f32 %v2126, %v2516
    %2518 = vmatpush1.msra.mxu0 %v2517
    %2519 = vmatprep.subr.mxu0 0.0
    %v2520 = vand.u32 %v2127, 4294901760
    %v2521 = vsub.f32 %v2127, %v2520
    %2522 = vmatpush1.msra.mxu0 %v2521
    %2523 = vmatprep.subr.mxu0 0.0
    %v2524 = vand.u32 %v2128, 4294901760
    %v2525 = vsub.f32 %v2128, %v2524
    %2526 = vmatpush1.msra.mxu0 %v2525
    %2527 = vmatprep.subr.mxu0 0.0
    %v2528 = vand.u32 %v2129, 4294901760
    %v2529 = vsub.f32 %v2129, %v2528
    %2530 = vmatpush1.msra.mxu0 %v2529
    %2531 = vmatprep.subr.mxu0 0.0
    %v2532 = vand.u32 %v2130, 4294901760
    %v2533 = vsub.f32 %v2130, %v2532
    %2534 = vmatpush1.msra.mxu0 %v2533
    %2535 = vmatprep.subr.mxu0 0.0
    %v2536 = vand.u32 %v2131, 4294901760
    %v2537 = vsub.f32 %v2131, %v2536
    %2538 = vmatpush1.msra.mxu0 %v2537
    %2539 = vmatprep.subr.mxu0 0.0
    %v2540 = vand.u32 %v2132, 4294901760
    %v2541 = vsub.f32 %v2132, %v2540
    %2542 = vmatpush1.msra.mxu0 %v2541
    %2543 = vmatprep.subr.mxu0 0.0
    %v2544 = vand.u32 %v2133, 4294901760
    %v2545 = vsub.f32 %v2133, %v2544
    %2546 = vmatpush1.msra.mxu0 %v2545
    %2547 = vmatprep.subr.mxu0 0.0
    %v2548 = vand.u32 %v2134, 4294901760
    %v2549 = vsub.f32 %v2134, %v2548
    %2550 = vmatpush1.msra.mxu0 %v2549
    %2551 = vmatprep.subr.mxu0 0.0
    %v2552 = vand.u32 %v2135, 4294901760
    %v2553 = vsub.f32 %v2135, %v2552
    %2554 = vmatpush1.msra.mxu0 %v2553
    %2555 = vmatprep.subr.mxu0 0.0
    %v2556 = vand.u32 %v2136, 4294901760
    %v2557 = vsub.f32 %v2136, %v2556
    %2558 = vmatpush1.msra.mxu0 %v2557
    %2559 = vmatprep.subr.mxu0 0.0
    %v2560 = vand.u32 %v2137, 4294901760
    %v2561 = vsub.f32 %v2137, %v2560
    %2562 = vmatpush1.msra.mxu0 %v2561
    %2563 = vmatprep.subr.mxu0 0.0
    %v2564 = vand.u32 %v2138, 4294901760
    %v2565 = vsub.f32 %v2138, %v2564
    %2566 = vmatpush1.msra.mxu0 %v2565
    %2567 = vmatprep.subr.mxu0 0.0
    %v2568 = vand.u32 %v2139, 4294901760
    %v2569 = vsub.f32 %v2139, %v2568
    %2570 = vmatpush1.msra.mxu0 %v2569
    %2571 = vmatprep.subr.mxu0 0.0
    %v2572 = vand.u32 %v2140, 4294901760
    %v2573 = vsub.f32 %v2140, %v2572
    %2574 = vmatpush1.msra.mxu0 %v2573
    %2575 = vmatprep.subr.mxu0 0.0
    %v2576 = vand.u32 %v2141, 4294901760
    %v2577 = vsub.f32 %v2141, %v2576
    %2578 = vmatpush1.msra.mxu0 %v2577
    %2579 = vmatprep.subr.mxu0 0.0
    %v2580 = vand.u32 %v2142, 4294901760
    %v2581 = vsub.f32 %v2142, %v2580
    %2582 = vmatpush1.msra.mxu0 %v2581
    %2583 = vmatprep.subr.mxu0 0.0
    %v2584 = vand.u32 %v2143, 4294901760
    %v2585 = vsub.f32 %v2143, %v2584
    %2586 = vmatpush1.msra.mxu0 %v2585
    %2587 = vmatprep.subr.mxu0 0.0
    %v2588 = vand.u32 %v2144, 4294901760
    %v2589 = vsub.f32 %v2144, %v2588
    %2590 = vmatpush1.msra.mxu0 %v2589
    %2591 = vmatprep.subr.mxu0 0.0
    %v2592 = vand.u32 %v2145, 4294901760
    %v2593 = vsub.f32 %v2145, %v2592
    %2594 = vmatpush1.msra.mxu0 %v2593
    %2595 = vmatprep.subr.mxu0 0.0
    %v2596 = vand.u32 %v2146, 4294901760
    %v2597 = vsub.f32 %v2146, %v2596
    %2598 = vmatpush1.msra.mxu0 %v2597
    %2599 = vmatprep.subr.mxu0 0.0
    %v2600 = vand.u32 %v2147, 4294901760
    %v2601 = vsub.f32 %v2147, %v2600
    %2602 = vmatpush1.msra.mxu0 %v2601
    %2603 = vmatprep.subr.mxu0 0.0
    %v2604 = vand.u32 %v2148, 4294901760
    %v2605 = vsub.f32 %v2148, %v2604
    %2606 = vmatpush1.msra.mxu0 %v2605
    %2607 = vmatprep.subr.mxu0 0.0
    %v2608 = vand.u32 %v2149, 4294901760
    %v2609 = vsub.f32 %v2149, %v2608
    %2610 = vmatpush1.msra.mxu0 %v2609
    %2611 = vmatprep.subr.mxu0 0.0
    %v2612 = vand.u32 %v2150, 4294901760
    %v2613 = vsub.f32 %v2150, %v2612
    %2614 = vmatpush1.msra.mxu0 %v2613
    %2615 = vmatprep.subr.mxu0 0.0
    %v2616 = vand.u32 %v2151, 4294901760
    %v2617 = vsub.f32 %v2151, %v2616
    %2618 = vmatpush1.msra.mxu0 %v2617
    %2619 = vmatprep.subr.mxu0 0.0
    %v2620 = vand.u32 %v2152, 4294901760
    %v2621 = vsub.f32 %v2152, %v2620
    %2622 = vmatpush1.msra.mxu0 %v2621
    %2623 = vmatprep.subr.mxu0 0.0
    %v2624 = vand.u32 %v2153, 4294901760
    %v2625 = vsub.f32 %v2153, %v2624
    %2626 = vmatpush1.msra.mxu0 %v2625
    %2627 = vmatprep.subr.mxu0 0.0
    %v2628 = vand.u32 %v2154, 4294901760
    %v2629 = vsub.f32 %v2154, %v2628
    %2630 = vmatpush1.msra.mxu0 %v2629
    %2631 = vmatprep.subr.mxu0 0.0
    %v2632 = vand.u32 %v2155, 4294901760
    %v2633 = vsub.f32 %v2155, %v2632
    %2634 = vmatpush1.msra.mxu0 %v2633
    %v2635 = vand.u32 %v2123, 4294901760
    %v2636 = vsub.f32 %v2123, %v2635
    %2637 = vmatprep.mubr.f32.mxu0 %v2636
    %v2638 = vand.u32 %v2122, 4294901760
    %v2639 = vsub.f32 %v2122, %v2638
    %2640 = vmatmul.mubr.f32.gmra.mrb[0].mxu0 %v2639
    %v2641 = vpop.f32.mrb[0].mxu0
    %v2642 = vadd.f32 %v2504, %v2641
    %v2643 = vpop.f32.mrb[0].mxu0
    %2644 = vdwg.mxu0
    %2645 = vmatprep.subr.mxu0 0.0
    %v2646 = vand.u32 %v2124, 4294901760
    %2647 = vmatpush1.msra.mxu0 %v2646
    %2648 = vmatprep.subr.mxu0 0.0
    %v2649 = vand.u32 %v2125, 4294901760
    %2650 = vmatpush1.msra.mxu0 %v2649
    %2651 = vmatprep.subr.mxu0 0.0
    %v2652 = vand.u32 %v2126, 4294901760
    %2653 = vmatpush1.msra.mxu0 %v2652
    %2654 = vmatprep.subr.mxu0 0.0
    %v2655 = vand.u32 %v2127, 4294901760
    %2656 = vmatpush1.msra.mxu0 %v2655
    %2657 = vmatprep.subr.mxu0 0.0
    %v2658 = vand.u32 %v2128, 4294901760
    %2659 = vmatpush1.msra.mxu0 %v2658
    %2660 = vmatprep.subr.mxu0 0.0
    %v2661 = vand.u32 %v2129, 4294901760
    %2662 = vmatpush1.msra.mxu0 %v2661
    %2663 = vmatprep.subr.mxu0 0.0
    %v2664 = vand.u32 %v2130, 4294901760
    %2665 = vmatpush1.msra.mxu0 %v2664
    %2666 = vmatprep.subr.mxu0 0.0
    %v2667 = vand.u32 %v2131, 4294901760
    %2668 = vmatpush1.msra.mxu0 %v2667
    %2669 = vmatprep.subr.mxu0 0.0
    %v2670 = vand.u32 %v2132, 4294901760
    %2671 = vmatpush1.msra.mxu0 %v2670
    %2672 = vmatprep.subr.mxu0 0.0
    %v2673 = vand.u32 %v2133, 4294901760
    %2674 = vmatpush1.msra.mxu0 %v2673
    %2675 = vmatprep.subr.mxu0 0.0
    %v2676 = vand.u32 %v2134, 4294901760
    %2677 = vmatpush1.msra.mxu0 %v2676
    %2678 = vmatprep.subr.mxu0 0.0
    %v2679 = vand.u32 %v2135, 4294901760
    %2680 = vmatpush1.msra.mxu0 %v2679
    %2681 = vmatprep.subr.mxu0 0.0
    %v2682 = vand.u32 %v2136, 4294901760
    %2683 = vmatpush1.msra.mxu0 %v2682
    %2684 = vmatprep.subr.mxu0 0.0
    %v2685 = vand.u32 %v2137, 4294901760
    %2686 = vmatpush1.msra.mxu0 %v2685
    %2687 = vmatprep.subr.mxu0 0.0
    %v2688 = vand.u32 %v2138, 4294901760
    %2689 = vmatpush1.msra.mxu0 %v2688
    %2690 = vmatprep.subr.mxu0 0.0
    %v2691 = vand.u32 %v2139, 4294901760
    %2692 = vmatpush1.msra.mxu0 %v2691
    %2693 = vmatprep.subr.mxu0 0.0
    %v2694 = vand.u32 %v2140, 4294901760
    %2695 = vmatpush1.msra.mxu0 %v2694
    %2696 = vmatprep.subr.mxu0 0.0
    %v2697 = vand.u32 %v2141, 4294901760
    %2698 = vmatpush1.msra.mxu0 %v2697
    %2699 = vmatprep.subr.mxu0 0.0
    %v2700 = vand.u32 %v2142, 4294901760
    %2701 = vmatpush1.msra.mxu0 %v2700
    %2702 = vmatprep.subr.mxu0 0.0
    %v2703 = vand.u32 %v2143, 4294901760
    %2704 = vmatpush1.msra.mxu0 %v2703
    %2705 = vmatprep.subr.mxu0 0.0
    %v2706 = vand.u32 %v2144, 4294901760
    %2707 = vmatpush1.msra.mxu0 %v2706
    %2708 = vmatprep.subr.mxu0 0.0
    %v2709 = vand.u32 %v2145, 4294901760
    %2710 = vmatpush1.msra.mxu0 %v2709
    %2711 = vmatprep.subr.mxu0 0.0
    %v2712 = vand.u32 %v2146, 4294901760
    %2713 = vmatpush1.msra.mxu0 %v2712
    %2714 = vmatprep.subr.mxu0 0.0
    %v2715 = vand.u32 %v2147, 4294901760
    %2716 = vmatpush1.msra.mxu0 %v2715
    %2717 = vmatprep.subr.mxu0 0.0
    %v2718 = vand.u32 %v2148, 4294901760
    %2719 = vmatpush1.msra.mxu0 %v2718
    %2720 = vmatprep.subr.mxu0 0.0
    %v2721 = vand.u32 %v2149, 4294901760
    %2722 = vmatpush1.msra.mxu0 %v2721
    %2723 = vmatprep.subr.mxu0 0.0
    %v2724 = vand.u32 %v2150, 4294901760
    %2725 = vmatpush1.msra.mxu0 %v2724
    %2726 = vmatprep.subr.mxu0 0.0
    %v2727 = vand.u32 %v2151, 4294901760
    %2728 = vmatpush1.msra.mxu0 %v2727
    %2729 = vmatprep.subr.mxu0 0.0
    %v2730 = vand.u32 %v2152, 4294901760
    %2731 = vmatpush1.msra.mxu0 %v2730
    %2732 = vmatprep.subr.mxu0 0.0
    %v2733 = vand.u32 %v2153, 4294901760
    %2734 = vmatpush1.msra.mxu0 %v2733
    %2735 = vmatprep.subr.mxu0 0.0
    %v2736 = vand.u32 %v2154, 4294901760
    %2737 = vmatpush1.msra.mxu0 %v2736
    %2738 = vmatprep.subr.mxu0 0.0
    %v2739 = vand.u32 %v2155, 4294901760
    %2740 = vmatpush1.msra.mxu0 %v2739
    %v2741 = vand.u32 %v2123, 4294901760
    %v2742 = vsub.f32 %v2123, %v2741
    %v2743 = vand.u32 %v2742, 4294901760
    %2744 = vmatprep.mubr.f32.mxu0 %v2743
    %v2745 = vand.u32 %v2122, 4294901760
    %v2746 = vsub.f32 %v2122, %v2745
    %v2747 = vand.u32 %v2746, 4294901760
    %2748 = vmatmul.mubr.f32.gmra.mrb[0].mxu0 %v2747
    %v2749 = vpop.f32.mrb[0].mxu0
    %v2750 = vadd.f32 %v2642, %v2749
    %v2751 = vpop.f32.mrb[0].mxu0
    %2752 = vdwg.mxu0
    %2753 = vmatprep.subr.mxu0 0.0
    %v2754 = vand.u32 %v2124, 4294901760
    %v2755 = vsub.f32 %v2124, %v2754
    %v2756 = vand.u32 %v2755, 4294901760
    %2757 = vmatpush1.msra.mxu0 %v2756
    %2758 = vmatprep.subr.mxu0 0.0
    %v2759 = vand.u32 %v2125, 4294901760
    %v2760 = vsub.f32 %v2125, %v2759
    %v2761 = vand.u32 %v2760, 4294901760
    %2762 = vmatpush1.msra.mxu0 %v2761
    %2763 = vmatprep.subr.mxu0 0.0
    %v2764 = vand.u32 %v2126, 4294901760
    %v2765 = vsub.f32 %v2126, %v2764
    %v2766 = vand.u32 %v2765, 4294901760
    %2767 = vmatpush1.msra.mxu0 %v2766
    %2768 = vmatprep.subr.mxu0 0.0
    %v2769 = vand.u32 %v2127, 4294901760
    %v2770 = vsub.f32 %v2127, %v2769
    %v2771 = vand.u32 %v2770, 4294901760
    %2772 = vmatpush1.msra.mxu0 %v2771
    %2773 = vmatprep.subr.mxu0 0.0
    %v2774 = vand.u32 %v2128, 4294901760
    %v2775 = vsub.f32 %v2128, %v2774
    %v2776 = vand.u32 %v2775, 4294901760
    %2777 = vmatpush1.msra.mxu0 %v2776
    %2778 = vmatprep.subr.mxu0 0.0
    %v2779 = vand.u32 %v2129, 4294901760
    %v2780 = vsub.f32 %v2129, %v2779
    %v2781 = vand.u32 %v2780, 4294901760
    %2782 = vmatpush1.msra.mxu0 %v2781
    %2783 = vmatprep.subr.mxu0 0.0
    %v2784 = vand.u32 %v2130, 4294901760
    %v2785 = vsub.f32 %v2130, %v2784
    %v2786 = vand.u32 %v2785, 4294901760
    %2787 = vmatpush1.msra.mxu0 %v2786
    %2788 = vmatprep.subr.mxu0 0.0
    %v2789 = vand.u32 %v2131, 4294901760
    %v2790 = vsub.f32 %v2131, %v2789
    %v2791 = vand.u32 %v2790, 4294901760
    %2792 = vmatpush1.msra.mxu0 %v2791
    %2793 = vmatprep.subr.mxu0 0.0
    %v2794 = vand.u32 %v2132, 4294901760
    %v2795 = vsub.f32 %v2132, %v2794
    %v2796 = vand.u32 %v2795, 4294901760
    %2797 = vmatpush1.msra.mxu0 %v2796
    %2798 = vmatprep.subr.mxu0 0.0
    %v2799 = vand.u32 %v2133, 4294901760
    %v2800 = vsub.f32 %v2133, %v2799
    %v2801 = vand.u32 %v2800, 4294901760
    %2802 = vmatpush1.msra.mxu0 %v2801
    %2803 = vmatprep.subr.mxu0 0.0
    %v2804 = vand.u32 %v2134, 4294901760
    %v2805 = vsub.f32 %v2134, %v2804
    %v2806 = vand.u32 %v2805, 4294901760
    %2807 = vmatpush1.msra.mxu0 %v2806
    %2808 = vmatprep.subr.mxu0 0.0
    %v2809 = vand.u32 %v2135, 4294901760
    %v2810 = vsub.f32 %v2135, %v2809
    %v2811 = vand.u32 %v2810, 4294901760
    %2812 = vmatpush1.msra.mxu0 %v2811
    %2813 = vmatprep.subr.mxu0 0.0
    %v2814 = vand.u32 %v2136, 4294901760
    %v2815 = vsub.f32 %v2136, %v2814
    %v2816 = vand.u32 %v2815, 4294901760
    %2817 = vmatpush1.msra.mxu0 %v2816
    %2818 = vmatprep.subr.mxu0 0.0
    %v2819 = vand.u32 %v2137, 4294901760
    %v2820 = vsub.f32 %v2137, %v2819
    %v2821 = vand.u32 %v2820, 4294901760
    %2822 = vmatpush1.msra.mxu0 %v2821
    %2823 = vmatprep.subr.mxu0 0.0
    %v2824 = vand.u32 %v2138, 4294901760
    %v2825 = vsub.f32 %v2138, %v2824
    %v2826 = vand.u32 %v2825, 4294901760
    %2827 = vmatpush1.msra.mxu0 %v2826
    %2828 = vmatprep.subr.mxu0 0.0
    %v2829 = vand.u32 %v2139, 4294901760
    %v2830 = vsub.f32 %v2139, %v2829
    %v2831 = vand.u32 %v2830, 4294901760
    %2832 = vmatpush1.msra.mxu0 %v2831
    %2833 = vmatprep.subr.mxu0 0.0
    %v2834 = vand.u32 %v2140, 4294901760
    %v2835 = vsub.f32 %v2140, %v2834
    %v2836 = vand.u32 %v2835, 4294901760
    %2837 = vmatpush1.msra.mxu0 %v2836
    %2838 = vmatprep.subr.mxu0 0.0
    %v2839 = vand.u32 %v2141, 4294901760
    %v2840 = vsub.f32 %v2141, %v2839
    %v2841 = vand.u32 %v2840, 4294901760
    %2842 = vmatpush1.msra.mxu0 %v2841
    %2843 = vmatprep.subr.mxu0 0.0
    %v2844 = vand.u32 %v2142, 4294901760
    %v2845 = vsub.f32 %v2142, %v2844
    %v2846 = vand.u32 %v2845, 4294901760
    %2847 = vmatpush1.msra.mxu0 %v2846
    %2848 = vmatprep.subr.mxu0 0.0
    %v2849 = vand.u32 %v2143, 4294901760
    %v2850 = vsub.f32 %v2143, %v2849
    %v2851 = vand.u32 %v2850, 4294901760
    %2852 = vmatpush1.msra.mxu0 %v2851
    %2853 = vmatprep.subr.mxu0 0.0
    %v2854 = vand.u32 %v2144, 4294901760
    %v2855 = vsub.f32 %v2144, %v2854
    %v2856 = vand.u32 %v2855, 4294901760
    %2857 = vmatpush1.msra.mxu0 %v2856
    %2858 = vmatprep.subr.mxu0 0.0
    %v2859 = vand.u32 %v2145, 4294901760
    %v2860 = vsub.f32 %v2145, %v2859
    %v2861 = vand.u32 %v2860, 4294901760
    %2862 = vmatpush1.msra.mxu0 %v2861
    %2863 = vmatprep.subr.mxu0 0.0
    %v2864 = vand.u32 %v2146, 4294901760
    %v2865 = vsub.f32 %v2146, %v2864
    %v2866 = vand.u32 %v2865, 4294901760
    %2867 = vmatpush1.msra.mxu0 %v2866
    %2868 = vmatprep.subr.mxu0 0.0
    %v2869 = vand.u32 %v2147, 4294901760
    %v2870 = vsub.f32 %v2147, %v2869
    %v2871 = vand.u32 %v2870, 4294901760
    %2872 = vmatpush1.msra.mxu0 %v2871
    %2873 = vmatprep.subr.mxu0 0.0
    %v2874 = vand.u32 %v2148, 4294901760
    %v2875 = vsub.f32 %v2148, %v2874
    %v2876 = vand.u32 %v2875, 4294901760
    %2877 = vmatpush1.msra.mxu0 %v2876
    %2878 = vmatprep.subr.mxu0 0.0
    %v2879 = vand.u32 %v2149, 4294901760
    %v2880 = vsub.f32 %v2149, %v2879
    %v2881 = vand.u32 %v2880, 4294901760
    %2882 = vmatpush1.msra.mxu0 %v2881
    %2883 = vmatprep.subr.mxu0 0.0
    %v2884 = vand.u32 %v2150, 4294901760
    %v2885 = vsub.f32 %v2150, %v2884
    %v2886 = vand.u32 %v2885, 4294901760
    %2887 = vmatpush1.msra.mxu0 %v2886
    %2888 = vmatprep.subr.mxu0 0.0
    %v2889 = vand.u32 %v2151, 4294901760
    %v2890 = vsub.f32 %v2151, %v2889
    %v2891 = vand.u32 %v2890, 4294901760
    %2892 = vmatpush1.msra.mxu0 %v2891
    %2893 = vmatprep.subr.mxu0 0.0
    %v2894 = vand.u32 %v2152, 4294901760
    %v2895 = vsub.f32 %v2152, %v2894
    %v2896 = vand.u32 %v2895, 4294901760
    %2897 = vmatpush1.msra.mxu0 %v2896
    %2898 = vmatprep.subr.mxu0 0.0
    %v2899 = vand.u32 %v2153, 4294901760
    %v2900 = vsub.f32 %v2153, %v2899
    %v2901 = vand.u32 %v2900, 4294901760
    %2902 = vmatpush1.msra.mxu0 %v2901
    %2903 = vmatprep.subr.mxu0 0.0
    %v2904 = vand.u32 %v2154, 4294901760
    %v2905 = vsub.f32 %v2154, %v2904
    %v2906 = vand.u32 %v2905, 4294901760
    %2907 = vmatpush1.msra.mxu0 %v2906
    %2908 = vmatprep.subr.mxu0 0.0
    %v2909 = vand.u32 %v2155, 4294901760
    %v2910 = vsub.f32 %v2155, %v2909
    %v2911 = vand.u32 %v2910, 4294901760
    %2912 = vmatpush1.msra.mxu0 %v2911
    %v2913 = vand.u32 %v2123, 4294901760
    %2914 = vmatprep.mubr.f32.mxu0 %v2913
    %v2915 = vand.u32 %v2122, 4294901760
    %2916 = vmatmul.mubr.f32.gmra.mrb[0].mxu0 %v2915
    %v2917 = vpop.f32.mrb[0].mxu0
    %v2918 = vadd.f32 %v2750, %v2917
    %v2919 = vpop.f32.mrb[0].mxu0
    %2920 = vdwg.mxu0
    %2921 = vmatprep.subr.mxu0 0.0
    %v2922 = vand.u32 %v2124, 4294901760
    %2923 = vmatpush1.msra.mxu0 %v2922
    %2924 = vmatprep.subr.mxu0 0.0
    %v2925 = vand.u32 %v2125, 4294901760
    %2926 = vmatpush1.msra.mxu0 %v2925
    %2927 = vmatprep.subr.mxu0 0.0
    %v2928 = vand.u32 %v2126, 4294901760
    %2929 = vmatpush1.msra.mxu0 %v2928
    %2930 = vmatprep.subr.mxu0 0.0
    %v2931 = vand.u32 %v2127, 4294901760
    %2932 = vmatpush1.msra.mxu0 %v2931
    %2933 = vmatprep.subr.mxu0 0.0
    %v2934 = vand.u32 %v2128, 4294901760
    %2935 = vmatpush1.msra.mxu0 %v2934
    %2936 = vmatprep.subr.mxu0 0.0
    %v2937 = vand.u32 %v2129, 4294901760
    %2938 = vmatpush1.msra.mxu0 %v2937
    %2939 = vmatprep.subr.mxu0 0.0
    %v2940 = vand.u32 %v2130, 4294901760
    %2941 = vmatpush1.msra.mxu0 %v2940
    %2942 = vmatprep.subr.mxu0 0.0
    %v2943 = vand.u32 %v2131, 4294901760
    %2944 = vmatpush1.msra.mxu0 %v2943
    %2945 = vmatprep.subr.mxu0 0.0
    %v2946 = vand.u32 %v2132, 4294901760
    %2947 = vmatpush1.msra.mxu0 %v2946
    %2948 = vmatprep.subr.mxu0 0.0
    %v2949 = vand.u32 %v2133, 4294901760
    %2950 = vmatpush1.msra.mxu0 %v2949
    %2951 = vmatprep.subr.mxu0 0.0
    %v2952 = vand.u32 %v2134, 4294901760
    %2953 = vmatpush1.msra.mxu0 %v2952
    %2954 = vmatprep.subr.mxu0 0.0
    %v2955 = vand.u32 %v2135, 4294901760
    %2956 = vmatpush1.msra.mxu0 %v2955
    %2957 = vmatprep.subr.mxu0 0.0
    %v2958 = vand.u32 %v2136, 4294901760
    %2959 = vmatpush1.msra.mxu0 %v2958
    %2960 = vmatprep.subr.mxu0 0.0
    %v2961 = vand.u32 %v2137, 4294901760
    %2962 = vmatpush1.msra.mxu0 %v2961
    %2963 = vmatprep.subr.mxu0 0.0
    %v2964 = vand.u32 %v2138, 4294901760
    %2965 = vmatpush1.msra.mxu0 %v2964
    %2966 = vmatprep.subr.mxu0 0.0
    %v2967 = vand.u32 %v2139, 4294901760
    %2968 = vmatpush1.msra.mxu0 %v2967
    %2969 = vmatprep.subr.mxu0 0.0
    %v2970 = vand.u32 %v2140, 4294901760
    %2971 = vmatpush1.msra.mxu0 %v2970
    %2972 = vmatprep.subr.mxu0 0.0
    %v2973 = vand.u32 %v2141, 4294901760
    %2974 = vmatpush1.msra.mxu0 %v2973
    %2975 = vmatprep.subr.mxu0 0.0
    %v2976 = vand.u32 %v2142, 4294901760
    %2977 = vmatpush1.msra.mxu0 %v2976
    %2978 = vmatprep.subr.mxu0 0.0
    %v2979 = vand.u32 %v2143, 4294901760
    %2980 = vmatpush1.msra.mxu0 %v2979
    %2981 = vmatprep.subr.mxu0 0.0
    %v2982 = vand.u32 %v2144, 4294901760
    %2983 = vmatpush1.msra.mxu0 %v2982
    %2984 = vmatprep.subr.mxu0 0.0
    %v2985 = vand.u32 %v2145, 4294901760
    %2986 = vmatpush1.msra.mxu0 %v2985
    %2987 = vmatprep.subr.mxu0 0.0
    %v2988 = vand.u32 %v2146, 4294901760
    %2989 = vmatpush1.msra.mxu0 %v2988
    %2990 = vmatprep.subr.mxu0 0.0
    %v2991 = vand.u32 %v2147, 4294901760
    %2992 = vmatpush1.msra.mxu0 %v2991
    %2993 = vmatprep.subr.mxu0 0.0
    %v2994 = vand.u32 %v2148, 4294901760
    %2995 = vmatpush1.msra.mxu0 %v2994
    %2996 = vmatprep.subr.mxu0 0.0
    %v2997 = vand.u32 %v2149, 4294901760
    %2998 = vmatpush1.msra.mxu0 %v2997
    %2999 = vmatprep.subr.mxu0 0.0
    %v3000 = vand.u32 %v2150, 4294901760
    %3001 = vmatpush1.msra.mxu0 %v3000
    %3002 = vmatprep.subr.mxu0 0.0
    %v3003 = vand.u32 %v2151, 4294901760
    %3004 = vmatpush1.msra.mxu0 %v3003
    %3005 = vmatprep.subr.mxu0 0.0
    %v3006 = vand.u32 %v2152, 4294901760
    %3007 = vmatpush1.msra.mxu0 %v3006
    %3008 = vmatprep.subr.mxu0 0.0
    %v3009 = vand.u32 %v2153, 4294901760
    %3010 = vmatpush1.msra.mxu0 %v3009
    %3011 = vmatprep.subr.mxu0 0.0
    %v3012 = vand.u32 %v2154, 4294901760
    %3013 = vmatpush1.msra.mxu0 %v3012
    %3014 = vmatprep.subr.mxu0 0.0
    %v3015 = vand.u32 %v2155, 4294901760
    %3016 = vmatpush1.msra.mxu0 %v3015
    %v3017 = vand.u32 %v2123, 4294901760
    %3018 = vmatprep.mubr.f32.mxu0 %v3017
    %v3019 = vand.u32 %v2122, 4294901760
    %3020 = vmatmul.mubr.f32.gmra.mrb[0].mxu0 %v3019
    %v3021 = vpop.f32.mrb[0].mxu0
    %v3022 = vadd.f32 %v2918, %v3021
    %v3023 = vpop.f32.mrb[0].mxu0
    %3024 = vdwg.mxu0
    %3025 = vst [vmem:[#allocation10] sm:$0x3] %v3022
    // Predicated region
    $region46: #{tpu_custom_call.1} parent=1 // pred_check
      _
    $region47: #{tpu_custom_call.1} parent=1 // pred_check_branch
      %3027 = sbr.rel (0) target = $region49
    $region48: #{tpu_custom_call.1} parent=1 // pred_region
      %s3029 = ssub.s32 32, 32
      %3030 = vsyncadd [#allocation4], %s3029
      %s3032 = sshll.u32 [#allocation10], 4
      %s3033 = int_to_ptr.vmem [resolvable:$true] %s3032
      %3035 = dma.vmem_to_hbm [thread:$0]  %s3033, 32, %s7, [#allocation4]
    $region49: #{tpu_custom_call.1} parent=1 // pred_fallthru
      _
    // Predicated region
    $region50: #{tpu_custom_call.1} parent=1 // pred_check
      _
    $region51: #{tpu_custom_call.1} parent=1 // pred_check_branch
      %3037 = sbr.rel (0) target = $region53
    $region52: #{tpu_custom_call.1} parent=1 // pred_region
      %3038 = dma.done [#allocation4], 32
    $region53: #{tpu_custom_call.1} parent=1 // pred_fallthru
      _
    %3039 = vsyncpa [#allocation3], 1
    %3040 = vsyncpa [#allocation6], 1
    %3041 = vsyncpa [#allocation9], 1
    %3042 = vsyncpa [#allocation4], 1

</llo_original>
